<compile_context>
chip_gen: v6e
topology: v6e:2x2x1
jax: 0.10.0
libtpu: 0.0.40
codegen_flags: <defaults>
</compile_context>

<pallas_src>
import functools

import jax
import jax.numpy as jnp
from jax.experimental import pallas as pl
from jax.experimental.pallas import tpu as pltpu

NUM_HEADS = 4   # qA, qB, qC, s2
OUT_ROWS = 8    # output rows: [qA, qB, qC, s2, qmin, 0, 0, 0]


# ----------------------------------------------------------------------------- kernel
def critic_kernel(sT_ref, aT_ref, ws_ref, wa_ref, b1_ref, w2_ref, b2_ref, out_ref):
    """Whole Critic forward for one batch tile, feature-major (batch on lanes).

    sT_ref : (Ds, TB)   state, transposed                        (bf16)
    aT_ref : (Da, TB)   action, transposed                       (bf16)
    ws_ref : (4H, Ds)   composed layer-1 weight, state slice, transposed   (bf16)
    wa_ref : (4H, Da)   composed layer-1 weight, action slice, transposed  (bf16)
    b1_ref : (4H, 1)    composed layer-1 bias                    (f32)
    w2_ref : (8, 4H)    4 head second layers, block-diagonal rows 0..3     (f32)
    b2_ref : (8, 1)     matching biases in rows 0..3             (f32)
    out_ref: (8, TB)    rows 0..3 = heads, row 4 = min of rows 0..2
    """
    # Layer 1 of all 4 heads at once (input Linear already folded in at pack time).
    h1 = (jnp.dot(ws_ref[...], sT_ref[...], preferred_element_type=jnp.float32)
          + jnp.dot(wa_ref[...], aT_ref[...], preferred_element_type=jnp.float32)
          + b1_ref[...])                                                 # (4H, TB) f32
    h1 = jnp.sin(h1)                                                     # spectral act. (EUP)

    # Layer 2 of all 4 heads: block-diagonal matmul -> q in rows 0..3 (f32 operands).
    q = jnp.dot(w2_ref[...], h1, preferred_element_type=jnp.float32) + b2_ref[...]  # (8, TB)

    # qmin = min(qA, qB, qC) into row 4 (pure VPU, no cross-lane reduce).
    qmin = jnp.minimum(q[0:1, :], jnp.minimum(q[1:2, :], q[2:3, :]))     # (1, TB)
    row = jax.lax.broadcasted_iota(jnp.int32, q.shape, dimension=0)
    out_ref[...] = jnp.where(row == 4, qmin, q)


# ----------------------------------------------------------------------------- params
def init_critic_params(key, state_dim, action_dim, hidden_dim=32, dtype=jnp.float32):
    """PyTorch-style per-layer parameters (unpacked reference layout)."""
    din = state_dim + action_dim
    ks = jax.random.split(key, 6)

    def lin(k, fan_in, shape):
        bound = 1.0 / (fan_in ** 0.5)
        return jax.random.uniform(k, shape, dtype, -bound, bound)

    return dict(
        win=lin(ks[0], din, (din, hidden_dim)),                          # (Din, H)
        bin=lin(ks[1], din, (1, hidden_dim)),                            # (1, H)
        w1=lin(ks[2], hidden_dim, (NUM_HEADS, hidden_dim, hidden_dim)),  # (4, H, H)
        b1=lin(ks[3], hidden_dim, (NUM_HEADS, 1, hidden_dim)),           # (4, 1, H)
        w2=lin(ks[4], hidden_dim, (NUM_HEADS, hidden_dim, 1)),           # (4, H, 1)
        b2=lin(ks[5], hidden_dim, (NUM_HEADS, 1, 1)),                    # (4, 1, 1)
    )


def pack_critic_params(params, state_dim, mxu_dtype=jnp.bfloat16):
    """One-time host-side repack: fold the input Linear into the heads' layer-1
    (exact — no nonlinearity in between), then lay everything out feature-major."""
    H = params["win"].shape[1]

    # Heads' first layers side by side -> (H, 4H); compose with the input Linear in f32.
    w1_cat = jnp.concatenate([params["w1"][i] for i in range(NUM_HEADS)], axis=-1)  # (H, 4H)
    b1_cat = jnp.concatenate([params["b1"][i] for i in range(NUM_HEADS)], axis=-1)  # (1, 4H)
    wc = params["win"].astype(jnp.float32) @ w1_cat.astype(jnp.float32)             # (Din, 4H)
    bc = params["bin"].astype(jnp.float32) @ w1_cat.astype(jnp.float32) \
        + b1_cat.astype(jnp.float32)                                                # (1, 4H)

    # Split into state/action slices and transpose to feature-major (rows = 4H).
    ws_t = wc[:state_dim].T            # (4H, Ds)
    wa_t = wc[state_dim:].T            # (4H, Da)
    b1_t = bc.T                        # (4H, 1)

    # Heads' second layers, block-diagonal and transposed: row i belongs to head i.
    w2_t = jnp.zeros((OUT_ROWS, NUM_HEADS * H), jnp.float32)
    b2_t = jnp.zeros((OUT_ROWS, 1), jnp.float32)
    for i in range(NUM_HEADS):
        w2_t = w2_t.at[i, i * H:(i + 1) * H].set(params["w2"][i][:, 0])
        b2_t = b2_t.at[i, 0].set(params["b2"][i][0, 0])

    return dict(
        ws=ws_t.astype(mxu_dtype),     # bf16 MXU operand
        wa=wa_t.astype(mxu_dtype),     # bf16 MXU operand
        b1=b1_t.astype(jnp.float32),
        w2=w2_t,                       # keep f32 (tiny final matmul, feeds TD targets)
        b2=b2_t,
    )


# ----------------------------------------------------------------------------- wrapper
# Per-tile VMEM (transposed layout) ~ 0.7 KB per batch element; 8192 keeps a tile well
# under the v5e 16 MiB / v6e-v7x 32 MiB default scoped-VMEM limits with double-buffering.
_MAX_TB = 8192


def _pick_batch_tile(batch):
    # Small batches: one pass (block == full array, so no 128-divisibility needed).
    if batch < 2048:
        return batch
    # Large batches: a few big lane-aligned tiles. Two balanced tiles feed both v7x
    # TensorCores ("parallel" grid axis); extra steps on 1-TC v5e/v6e cost ~0.35us each.
    tb = -(-batch // 2)                # ceil(batch / 2)
    tb = -(-tb // 128) * 128           # round up to a lane multiple
    return min(_MAX_TB, tb)


@functools.partial(jax.jit, static_argnames=("united",))
def critic_forward(state, action, packed, united=False):
    B = state.shape[0]
    TB = _pick_batch_tile(B)
    grid = (pl.cdiv(B, TB),)           # partial last tile handled by Pallas (masked writeback)

    mxu_dtype = packed["ws"].dtype
    sT = state.astype(mxu_dtype).T     # (Ds, B) — batch on lanes (layout plumbing only)
    aT = action.astype(mxu_dtype).T    # (Da, B)

    h4, ds = packed["ws"].shape
    da = packed["wa"].shape[1]

    cost = pl.CostEstimate(
        flops=int(2 * B * ((ds + da) * h4 + h4 * OUT_ROWS)),
        transcendentals=int(B * h4),
        bytes_accessed=int(B * (2 * (ds + da) + 4 * OUT_ROWS)
                           + 2 * h4 * (ds + da) + 4 * h4
                           + 4 * OUT_ROWS * (h4 + 1)),
    )

    def whole(shape):  # grid-invariant weights/biases, whole array resident every step
        return pl.BlockSpec(shape, lambda i: (0, 0))

    out = pl.pallas_call(
        critic_kernel,
        out_shape=jax.ShapeDtypeStruct((OUT_ROWS, B), jnp.float32),
        grid=grid,
        in_specs=[
            pl.BlockSpec((ds, TB), lambda i: (0, i)),   # state tile   (lane-dense)
            pl.BlockSpec((da, TB), lambda i: (0, i)),   # action tile  (lane-dense)
            whole((h4, ds)),
            whole((h4, da)),
            whole((h4, 1)),
            whole((OUT_ROWS, h4)),
            whole((OUT_ROWS, 1)),
        ],
        out_specs=pl.BlockSpec((OUT_ROWS, TB), lambda i: (0, i)),
        compiler_params=pltpu.CompilerParams(dimension_semantics=("parallel",)),
        cost_estimate=cost,
    )(sT, aT, packed["ws"], packed["wa"], packed["b1"], packed["w2"], packed["b2"])

    if not united:
        # list of 4 (B, 1) Q estimates, matching the PyTorch return
        return [out[i].reshape(-1, 1) for i in range(NUM_HEADS)]
    # (min over qA/qB/qC, uncertainty estimate s2)
    return out[4].reshape(-1, 1), out[3].reshape(-1, 1)


# ----------------------------------------------------------------------------- reference
def critic_reference(state, action, params, united=False):
    """Pure-JAX f32 reference of the assumed Critic forward."""
    x = jnp.concatenate([state, action], axis=-1)
    h = x @ params["win"] + params["bin"]
    xs = []
    for i in range(NUM_HEADS):
        hi = jnp.sin(h @ params["w1"][i] + params["b1"][i])
        xs.append(hi @ params["w2"][i] + params["b2"][i])
    if not united:
        return xs
    qmin = jnp.min(jnp.concatenate(xs[:3], axis=-1), axis=-1, keepdims=True)
    return qmin, xs[3]


# ----------------------------------------------------------------------------- main
if __name__ == "__main__":
    key = jax.random.PRNGKey(0)
    k_param, k_state, k_action = jax.random.split(key, 3)

    batch, state_dim, action_dim, hidden_dim = 8, 12, 4, 32

    params = init_critic_params(k_param, state_dim, action_dim, hidden_dim)
    packed = pack_critic_params(params, state_dim)  # composed + transposed, bf16 MXU operands

    state = jax.random.normal(k_state, (batch, state_dim), jnp.float32)
    action = jax.random.normal(k_action, (batch, action_dim), jnp.float32)

    # united=False path: list of 4 Q estimates
    q_list = critic_forward(state, action, packed, united=False)
    # united=True path: (min Q over first 3 heads, uncertainty estimate)
    qmin, s2 = critic_forward(state, action, packed, united=True)
    jax.block_until_ready((q_list, qmin, s2))

    assert len(q_list) == NUM_HEADS and all(q.shape == (batch, 1) for q in q_list)
    assert qmin.shape == (batch, 1) and s2.shape == (batch, 1)

    # Correctness vs pure-JAX f32 reference (loose tolerance: bf16 MXU operands +
    # pack-time composition of the input Linear into head layer-1).
    ref_list = critic_reference(state, action, params, united=False)
    ref_qmin, ref_s2 = critic_reference(state, action, params, united=True)
    for q, rq in zip(q_list, ref_list):
        assert float(jnp.max(jnp.abs(q - rq))) < 0.1
    assert float(jnp.max(jnp.abs(qmin - ref_qmin))) < 0.1
    assert float(jnp.max(jnp.abs(s2 - ref_s2))) < 0.1

    print("KERNEL_OK")
</pallas_src>

<mosaic_0001>
module attributes {stable_mosaic.version = 11 : i64} {
  func.func @critic_kernel(%arg0: i32, %arg1: memref<12x8xbf16, #tpu.memory_space<vmem>>, %arg2: memref<4x8xbf16, #tpu.memory_space<vmem>>, %arg3: memref<128x12xbf16, #tpu.memory_space<vmem>>, %arg4: memref<128x4xbf16, #tpu.memory_space<vmem>>, %arg5: memref<128x1xf32, #tpu.memory_space<vmem>>, %arg6: memref<8x128xf32, #tpu.memory_space<vmem>>, %arg7: memref<8x1xf32, #tpu.memory_space<vmem>>, %arg8: memref<8x8xf32, #tpu.memory_space<vmem>>) attributes {dimension_semantics = [#tpu.dimension_semantics<parallel>], iteration_bounds = array<i64: 1>, scalar_prefetch = 0 : i64, scratch_operands = 0 : i64, tpu.core_type = #tpu.core_type<tc>, window_params = [{transform_indices = @transform_0, window_bounds = array<i64: 12, 8>}, {transform_indices = @transform_1, window_bounds = array<i64: 4, 8>}, {pipeline_mode = #tpu.pipeline_mode<synchronous>, transform_indices = @transform_2, window_bounds = array<i64: 128, 12>}, {pipeline_mode = #tpu.pipeline_mode<synchronous>, transform_indices = @transform_3, window_bounds = array<i64: 128, 4>}, {pipeline_mode = #tpu.pipeline_mode<synchronous>, transform_indices = @transform_4, window_bounds = array<i64: 128, 1>}, {pipeline_mode = #tpu.pipeline_mode<synchronous>, transform_indices = @transform_5, window_bounds = array<i64: 8, 128>}, {pipeline_mode = #tpu.pipeline_mode<synchronous>, transform_indices = @transform_6, window_bounds = array<i64: 8, 1>}, {transform_indices = @transform_7, window_bounds = array<i64: 8, 8>}]} {
    %c0 = arith.constant 0 : index
    %c0_0 = arith.constant 0 : index
    %0 = vector.load %arg3[%c0, %c0_0] : memref<128x12xbf16, #tpu.memory_space<vmem>>, vector<128x12xbf16>
    %c0_1 = arith.constant 0 : index
    %c0_2 = arith.constant 0 : index
    %1 = vector.load %arg1[%c0_1, %c0_2] : memref<12x8xbf16, #tpu.memory_space<vmem>>, vector<12x8xbf16>
    %cst = arith.constant dense<0.000000e+00> : vector<128x8xf32>
    %2 = tpu.matmul %0, %1, %cst {dimension_numbers = #tpu.dot_dimension_numbers<[1], [0], [0], [1], [0, 0, 1, 1], [], []>} : vector<128x12xbf16>, vector<12x8xbf16>, vector<128x8xf32> -> vector<128x8xf32>
    %c0_3 = arith.constant 0 : index
    %c0_4 = arith.constant 0 : index
    %3 = vector.load %arg4[%c0_3, %c0_4] : memref<128x4xbf16, #tpu.memory_space<vmem>>, vector<128x4xbf16>
    %c0_5 = arith.constant 0 : index
    %c0_6 = arith.constant 0 : index
    %4 = vector.load %arg2[%c0_5, %c0_6] : memref<4x8xbf16, #tpu.memory_space<vmem>>, vector<4x8xbf16>
    %cst_7 = arith.constant dense<0.000000e+00> : vector<128x8xf32>
    %5 = tpu.matmul %3, %4, %cst_7 {dimension_numbers = #tpu.dot_dimension_numbers<[1], [0], [0], [1], [0, 0, 1, 1], [], []>} : vector<128x4xbf16>, vector<4x8xbf16>, vector<128x8xf32> -> vector<128x8xf32>
    %6 = arith.addf %2, %5 : vector<128x8xf32>
    %c0_8 = arith.constant 0 : index
    %c0_9 = arith.constant 0 : index
    %7 = vector.load %arg5[%c0_8, %c0_9] : memref<128x1xf32, #tpu.memory_space<vmem>>, vector<128x1xf32>
    %8 = vector.broadcast %7 : vector<128x1xf32> to vector<128x8xf32>
    %9 = arith.addf %6, %8 : vector<128x8xf32>
    %10 = math.sin %9 : vector<128x8xf32>
    %c0_10 = arith.constant 0 : index
    %c0_11 = arith.constant 0 : index
    %11 = vector.load %arg6[%c0_10, %c0_11] : memref<8x128xf32, #tpu.memory_space<vmem>>, vector<8x128xf32>
    %cst_12 = arith.constant dense<0.000000e+00> : vector<8x8xf32>
    %12 = tpu.matmul %11, %10, %cst_12 {dimension_numbers = #tpu.dot_dimension_numbers<[1], [0], [0], [1], [0, 0, 1, 1], [], []>} : vector<8x128xf32>, vector<128x8xf32>, vector<8x8xf32> -> vector<8x8xf32>
    %c0_13 = arith.constant 0 : index
    %c0_14 = arith.constant 0 : index
    %13 = vector.load %arg7[%c0_13, %c0_14] : memref<8x1xf32, #tpu.memory_space<vmem>>, vector<8x1xf32>
    %14 = vector.broadcast %13 : vector<8x1xf32> to vector<8x8xf32>
    %15 = arith.addf %12, %14 : vector<8x8xf32>
    %16 = vector.extract_strided_slice %15 {offsets = [0, 0], sizes = [1, 8], strides = [1, 1]} : vector<8x8xf32> to vector<1x8xf32>
    %17 = vector.extract_strided_slice %15 {offsets = [1, 0], sizes = [1, 8], strides = [1, 1]} : vector<8x8xf32> to vector<1x8xf32>
    %18 = vector.extract_strided_slice %15 {offsets = [2, 0], sizes = [1, 8], strides = [1, 1]} : vector<8x8xf32> to vector<1x8xf32>
    %19 = arith.minimumf %17, %18 : vector<1x8xf32>
    %20 = arith.minimumf %16, %19 : vector<1x8xf32>
    %21 = tpu.iota {dimensions = array<i32: 0>} : vector<8x8xi32>
    %c4_i32 = arith.constant 4 : i32
    %22 = vector.broadcast %c4_i32 : i32 to vector<8x8xi32>
    %23 = arith.cmpi eq, %21, %22 : vector<8x8xi32>
    %24 = vector.shape_cast %20 : vector<1x8xf32> to vector<1x8xf32>
    %25 = vector.broadcast %24 : vector<1x8xf32> to vector<8x8xf32>
    %26 = arith.select %23, %25, %15 : vector<8x8xi1>, vector<8x8xf32>
    %c0_15 = arith.constant 0 : index
    %c0_16 = arith.constant 0 : index
    %27 = vector.load %arg8[%c0_15, %c0_16] : memref<8x8xf32, #tpu.memory_space<vmem>>, vector<8x8xf32>
    tpu.vector_store %arg8[%c0_15, %c0_16], %26 {strides = array<i32>} : memref<8x8xf32, #tpu.memory_space<vmem>>, vector<8x8xf32>,
    return
  }
  func.func @transform_0(%arg0: i32) -> (i32, i32) {
    %c0_i32 = arith.constant 0 : i32
    %c0_i32_0 = arith.constant 0 : i32
    return %c0_i32, %arg0 : i32, i32
  }
  func.func @transform_1(%arg0: i32) -> (i32, i32) {
    %c0_i32 = arith.constant 0 : i32
    %c0_i32_0 = arith.constant 0 : i32
    return %c0_i32, %arg0 : i32, i32
  }
  func.func @transform_2(%arg0: i32) -> (i32, i32) {
    %c0_i32 = arith.constant 0 : i32
    %c0_i32_0 = arith.constant 0 : i32
    %c0_i32_1 = arith.constant 0 : i32
    return %c0_i32, %c0_i32_0 : i32, i32
  }
  func.func @transform_3(%arg0: i32) -> (i32, i32) {
    %c0_i32 = arith.constant 0 : i32
    %c0_i32_0 = arith.constant 0 : i32
    %c0_i32_1 = arith.constant 0 : i32
    return %c0_i32, %c0_i32_0 : i32, i32
  }
  func.func @transform_4(%arg0: i32) -> (i32, i32) {
    %c0_i32 = arith.constant 0 : i32
    %c0_i32_0 = arith.constant 0 : i32
    %c0_i32_1 = arith.constant 0 : i32
    return %c0_i32, %c0_i32_0 : i32, i32
  }
  func.func @transform_5(%arg0: i32) -> (i32, i32) {
    %c0_i32 = arith.constant 0 : i32
    %c0_i32_0 = arith.constant 0 : i32
    %c0_i32_1 = arith.constant 0 : i32
    return %c0_i32, %c0_i32_0 : i32, i32
  }
  func.func @transform_6(%arg0: i32) -> (i32, i32) {
    %c0_i32 = arith.constant 0 : i32
    %c0_i32_0 = arith.constant 0 : i32
    %c0_i32_1 = arith.constant 0 : i32
    return %c0_i32, %c0_i32_0 : i32, i32
  }
  func.func @transform_7(%arg0: i32) -> (i32, i32) {
    %c0_i32 = arith.constant 0 : i32
    %c0_i32_0 = arith.constant 0 : i32
    return %c0_i32, %arg0 : i32, i32
  }
}

</mosaic_0001>

<llo_original>
// kernel: critic_forward.1
$region0: #{critic_forward.1}
  #allocation0 [shape = 'u32[]', space=smem, size = 0x4, offset = 0x4, fixed_abs, tag = 'smem constant byte address 0x4 - core index']
  #allocation1 [shape = 'u32[144,128]{1,0:T(1,128)}', space=vmem, size = 0x12000, scoped, tag = 'internal scratch']
  %s0 = inlined_call_operand.vmem [shape: bf16[12,8], index: 0, kind: input, shape index: {}]
  %s1 = inlined_call_operand.vmem [shape: bf16[4,8], index: 1, kind: input, shape index: {}]
  %s2 = inlined_call_operand.vmem [shape: bf16[128,12], index: 2, kind: input, shape index: {}]
  %s3 = inlined_call_operand.vmem [shape: bf16[128,4], index: 3, kind: input, shape index: {}]
  %s4 = inlined_call_operand.vmem [shape: f32[128,1], index: 4, kind: input, shape index: {}]
  %s5 = inlined_call_operand.vmem [shape: f32[8,128], index: 5, kind: input, shape index: {}]
  %s6 = inlined_call_operand.vmem [shape: f32[8,1], index: 6, kind: input, shape index: {}]
  %s7 = inlined_call_operand.vmem [shape: f32[8,8], index: 7, kind: output, shape index: {}]
  %s8 = sld [smem:[#allocation0]]
  $region38: #{critic_forward.1} parent=0
    _
  %s10 = ssub.s32 1, %s8
  %s11 = scalar_select 0, %s10, %s8
  // Predicated region
  $region2: #{critic_forward.1} parent=0 // pred_check
    _
  $region3: #{critic_forward.1} parent=0 // pred_check_branch
    %13 = sbr.rel (0) target = $region5
  $region4: #{critic_forward.1} parent=0 // pred_region
    _
  $region5: #{critic_forward.1} parent=0 // pred_fallthru
    _
  // Predicated region
  $region6: #{critic_forward.1} parent=0 // pred_check
    _
  $region7: #{critic_forward.1} parent=0 // pred_check_branch
    %15 = sbr.rel (0) target = $region9
  $region8: #{critic_forward.1} parent=0 // pred_region
    _
  $region9: #{critic_forward.1} parent=0 // pred_fallthru
    _
  // Predicated region
  $region10: #{critic_forward.1} parent=0 // pred_check
    _
  $region11: #{critic_forward.1} parent=0 // pred_check_branch
    %17 = sbr.rel (0) target = $region13
  $region12: #{critic_forward.1} parent=0 // pred_region
    _
  $region13: #{critic_forward.1} parent=0 // pred_fallthru
    _
  // Predicated region
  $region14: #{critic_forward.1} parent=0 // pred_check
    _
  $region15: #{critic_forward.1} parent=0 // pred_check_branch
    %19 = sbr.rel (0) target = $region17
  $region16: #{critic_forward.1} parent=0 // pred_region
    _
  $region17: #{critic_forward.1} parent=0 // pred_fallthru
    _
  // Predicated region
  $region18: #{critic_forward.1} parent=0 // pred_check
    _
  $region19: #{critic_forward.1} parent=0 // pred_check_branch
    %21 = sbr.rel (0) target = $region21
  $region20: #{critic_forward.1} parent=0 // pred_region
    _
  $region21: #{critic_forward.1} parent=0 // pred_fallthru
    _
  // Predicated region
  $region22: #{critic_forward.1} parent=0 // pred_check
    _
  $region23: #{critic_forward.1} parent=0 // pred_check_branch
    %23 = sbr.rel (0) target = $region25
  $region24: #{critic_forward.1} parent=0 // pred_region
    _
  $region25: #{critic_forward.1} parent=0 // pred_fallthru
    _
  // Predicated region
  $region26: #{critic_forward.1} parent=0 // pred_check
    _
  $region27: #{critic_forward.1} parent=0 // pred_check_branch
    %25 = sbr.rel (0) target = $region29
  $region28: #{critic_forward.1} parent=0 // pred_region
    _
  $region29: #{critic_forward.1} parent=0 // pred_fallthru
    _
  %v27 = vld [vmem:[%s2] sm:$0xf]
  %v28 = vld [vmem:[%s2 + $0x4] sm:$0xf]
  %v29 = vld [vmem:[%s2 + $0x8] sm:$0xf]
  %v30 = vld [vmem:[%s2 + $0xc] sm:$0xf]
  %v31 = vld [vmem:[%s2 + $0x10] sm:$0xf]
  %v32 = vld [vmem:[%s2 + $0x14] sm:$0xf]
  %v33 = vld [vmem:[%s2 + $0x18] sm:$0xf]
  %v34 = vld [vmem:[%s2 + $0x1c] sm:$0xf]
  %v35 = vld [vmem:[%s2 + $0x20] sm:$0xf]
  %v36 = vld [vmem:[%s2 + $0x24] sm:$0xf]
  %v37 = vld [vmem:[%s2 + $0x28] sm:$0xf]
  %v38 = vld [vmem:[%s2 + $0x2c] sm:$0xf]
  %v39 = vld [vmem:[%s2 + $0x30] sm:$0xf]
  %v40 = vld [vmem:[%s2 + $0x34] sm:$0xf]
  %v41 = vld [vmem:[%s2 + $0x38] sm:$0xf]
  %v42 = vld [vmem:[%s2 + $0x3c] sm:$0xf]
  %v43 = vld [vmem:[%s0] sm:$0xf]
  %v44 = vld [vmem:[%s0 + $0x4] sm:$0x3]
  %v45 = vld [vmem:[%s3] sm:$0xf]
  %v46 = vld [vmem:[%s3 + $0x4] sm:$0xf]
  %v47 = vld [vmem:[%s3 + $0x8] sm:$0xf]
  %v48 = vld [vmem:[%s3 + $0xc] sm:$0xf]
  %v49 = vld [vmem:[%s3 + $0x10] sm:$0xf]
  %v50 = vld [vmem:[%s3 + $0x14] sm:$0xf]
  %v51 = vld [vmem:[%s3 + $0x18] sm:$0xf]
  %v52 = vld [vmem:[%s3 + $0x1c] sm:$0xf]
  %v53 = vld [vmem:[%s3 + $0x20] sm:$0xf]
  %v54 = vld [vmem:[%s3 + $0x24] sm:$0xf]
  %v55 = vld [vmem:[%s3 + $0x28] sm:$0xf]
  %v56 = vld [vmem:[%s3 + $0x2c] sm:$0xf]
  %v57 = vld [vmem:[%s3 + $0x30] sm:$0xf]
  %v58 = vld [vmem:[%s3 + $0x34] sm:$0xf]
  %v59 = vld [vmem:[%s3 + $0x38] sm:$0xf]
  %v60 = vld [vmem:[%s3 + $0x3c] sm:$0xf]
  %v61 = vld [vmem:[%s1] sm:$0x3]
  %v78 = vunpack.c.l.b16 %v45
  %v79 = vunpack.c.l.b16 %v46
  %v80 = vunpack.c.l.b16 %v47
  %v81 = vunpack.c.l.b16 %v48
  %v82 = vunpack.c.l.b16 %v49
  %v83 = vunpack.c.l.b16 %v50
  %v84 = vunpack.c.l.b16 %v51
  %v85 = vunpack.c.l.b16 %v52
  %v86 = vunpack.c.l.b16 %v53
  %v87 = vunpack.c.l.b16 %v54
  %v88 = vunpack.c.l.b16 %v55
  %v89 = vunpack.c.l.b16 %v56
  %v90 = vunpack.c.l.b16 %v57
  %v91 = vunpack.c.l.b16 %v58
  %v92 = vunpack.c.l.b16 %v59
  %v93 = vunpack.c.l.b16 %v60
  %v94 = vpack.c.b16 %v79, %v78
  %v95 = vpack.c.b16 %v81, %v80
  %v96 = vpack.c.b16 %v83, %v82
  %v97 = vpack.c.b16 %v85, %v84
  %v98 = vpack.c.b16 %v87, %v86
  %v99 = vpack.c.b16 %v89, %v88
  %v100 = vpack.c.b16 %v91, %v90
  %v101 = vpack.c.b16 %v93, %v92
  %vm102 = vcmask 31744
  %v104 = vsel %vm102, %v94, 0
  %v107 = vsel %vm102, %v95, 0
  %v110 = vsel %vm102, %v96, 0
  %v113 = vsel %vm102, %v97, 0
  %v116 = vsel %vm102, %v98, 0
  %v119 = vsel %vm102, %v99, 0
  %v122 = vsel %vm102, %v100, 0
  %v125 = vsel %vm102, %v101, 0
  %vm127 = vcmask 1041408
  %v129 = vsel %vm127, %v61, 0
  %131 = vmatprep.subr.bf16.mxu0 0
  %132 = vmatpush1.bf16.msra.mxu0 0
  %133 = vmatprep.subr.bf16.mxu0 0
  %134 = vmatpush1.bf16.msra.mxu0 0
  %135 = vmatprep.subr.bf16.mxu0 0
  %136 = vmatpush1.bf16.msra.mxu0 0
  %137 = vmatprep.subr.bf16.mxu0 0
  %138 = vmatpush1.bf16.msra.mxu0 0
  %139 = vmatprep.subr.bf16.mxu0 0
  %140 = vmatpush1.bf16.msra.mxu0 0
  %141 = vmatprep.subr.bf16.mxu0 0
  %142 = vmatpush1.bf16.msra.mxu0 0
  %143 = vmatprep.subr.bf16.mxu0 0
  %144 = vmatpush1.bf16.msra.mxu0 0
  %145 = vmatprep.subr.bf16.mxu0 0
  %146 = vmatpush1.bf16.msra.mxu0 %v129
  %147 = vmatprep.subr.bf16.mxu0 0
  %148 = vmatpush2.bf16.msra.mxu0 0
  %149 = vmatprep.subr.bf16.mxu0 0
  %150 = vmatpush2.bf16.msra.mxu0 0
  %151 = vmatprep.subr.bf16.mxu0 0
  %152 = vmatpush2.bf16.msra.mxu0 0
  %153 = vmatprep.subr.bf16.mxu0 0
  %154 = vmatpush2.bf16.msra.mxu0 0
  %155 = vmatprep.subr.bf16.mxu0 0
  %156 = vmatpush2.bf16.msra.mxu0 0
  %157 = vmatprep.subr.bf16.mxu0 0
  %158 = vmatpush2.bf16.msra.mxu0 0
  %159 = vmatprep.subr.bf16.mxu0 0
  %160 = vmatpush2.bf16.msra.mxu0 0
  %161 = vmatprep.subr.bf16.mxu0 0
  %162 = vmatpush2.bf16.msra.mxu0 0
  %163 = vmatprep.mubr.bf16.mxu0 0
  %164 = vmatmul.mubr.bf16.gmra.mxu0 %v104
  %v165 = vpop.f32.mrf.mxu0
  %v166 = vadd.f32 0.0, %v165
  %v167 = vpop.f32.mrf.mxu0
  %v168 = vpop.f32.mrf.mxu0
  %v169 = vadd.f32 0.0, %v168
  %v170 = vpop.f32.mrf.mxu0
  %171 = vmatprep.mubr.bf16.mxu0 0
  %172 = vmatmul.mubr.bf16.gmra.mxu0 %v107
  %v173 = vpop.f32.mrf.mxu0
  %v174 = vadd.f32 0.0, %v173
  %v175 = vpop.f32.mrf.mxu0
  %v176 = vpop.f32.mrf.mxu0
  %v177 = vadd.f32 0.0, %v176
  %v178 = vpop.f32.mrf.mxu0
  %179 = vmatprep.mubr.bf16.mxu0 0
  %180 = vmatmul.mubr.bf16.gmra.mxu0 %v110
  %v181 = vpop.f32.mrf.mxu0
  %v182 = vadd.f32 0.0, %v181
  %v183 = vpop.f32.mrf.mxu0
  %v184 = vpop.f32.mrf.mxu0
  %v185 = vadd.f32 0.0, %v184
  %v186 = vpop.f32.mrf.mxu0
  %187 = vmatprep.mubr.bf16.mxu0 0
  %188 = vmatmul.mubr.bf16.gmra.mxu0 %v113
  %v189 = vpop.f32.mrf.mxu0
  %v190 = vadd.f32 0.0, %v189
  %v191 = vpop.f32.mrf.mxu0
  %v192 = vpop.f32.mrf.mxu0
  %v193 = vadd.f32 0.0, %v192
  %v194 = vpop.f32.mrf.mxu0
  %195 = vmatprep.mubr.bf16.mxu0 0
  %196 = vmatmul.mubr.bf16.gmra.mxu0 %v116
  %v197 = vpop.f32.mrf.mxu0
  %v198 = vadd.f32 0.0, %v197
  %v199 = vpop.f32.mrf.mxu0
  %v200 = vpop.f32.mrf.mxu0
  %v201 = vadd.f32 0.0, %v200
  %v202 = vpop.f32.mrf.mxu0
  %203 = vmatprep.mubr.bf16.mxu0 0
  %204 = vmatmul.mubr.bf16.gmra.mxu0 %v119
  %v205 = vpop.f32.mrf.mxu0
  %v206 = vadd.f32 0.0, %v205
  %v207 = vpop.f32.mrf.mxu0
  %v208 = vpop.f32.mrf.mxu0
  %v209 = vadd.f32 0.0, %v208
  %v210 = vpop.f32.mrf.mxu0
  %211 = vmatprep.mubr.bf16.mxu0 0
  %212 = vmatmul.mubr.bf16.gmra.mxu0 %v122
  %v213 = vpop.f32.mrf.mxu0
  %v214 = vadd.f32 0.0, %v213
  %v215 = vpop.f32.mrf.mxu0
  %v216 = vpop.f32.mrf.mxu0
  %v217 = vadd.f32 0.0, %v216
  %v218 = vpop.f32.mrf.mxu0
  %219 = vmatprep.mubr.bf16.mxu0 0
  %220 = vmatmul.mubr.bf16.gmra.mxu0 %v125
  %v221 = vpop.f32.mrf.mxu0
  %v222 = vadd.f32 0.0, %v221
  %v223 = vpop.f32.mrf.mxu0
  %v224 = vpop.f32.mrf.mxu0
  %v225 = vadd.f32 0.0, %v224
  %v226 = vpop.f32.mrf.mxu0
  %227 = vdwg.mxu0
  %v244 = vunpack.c.l.b16 %v27
  %v245 = vunpack.c.l.b16 %v28
  %v246 = vunpack.c.l.b16 %v29
  %v247 = vunpack.c.l.b16 %v30
  %v248 = vunpack.c.l.b16 %v31
  %v249 = vunpack.c.l.b16 %v32
  %v250 = vunpack.c.l.b16 %v33
  %v251 = vunpack.c.l.b16 %v34
  %v252 = vunpack.c.l.b16 %v35
  %v253 = vunpack.c.l.b16 %v36
  %v254 = vunpack.c.l.b16 %v37
  %v255 = vunpack.c.l.b16 %v38
  %v256 = vunpack.c.l.b16 %v39
  %v257 = vunpack.c.l.b16 %v40
  %v258 = vunpack.c.l.b16 %v41
  %v259 = vunpack.c.l.b16 %v42
  %v260 = vpack.c.b16 %v245, %v244
  %v261 = vpack.c.b16 %v247, %v246
  %v262 = vpack.c.b16 %v249, %v248
  %v263 = vpack.c.b16 %v251, %v250
  %v264 = vpack.c.b16 %v253, %v252
  %v265 = vpack.c.b16 %v255, %v254
  %v266 = vpack.c.b16 %v257, %v256
  %v267 = vpack.c.b16 %v259, %v258
  %v270 = vunpack.c.l.b16 %v43
  %v271 = vunpack.c.l.b16 %v44
  %v272 = vpack.c.b16 %v271, %v270
  %vm273 = vcmask 97280
  %v275 = vsel %vm273, %v260, 0
  %v278 = vsel %vm273, %v261, 0
  %v281 = vsel %vm273, %v262, 0
  %v284 = vsel %vm273, %v263, 0
  %v287 = vsel %vm273, %v264, 0
  %v290 = vsel %vm273, %v265, 0
  %v293 = vsel %vm273, %v266, 0
  %v296 = vsel %vm273, %v267, 0
  %vm298 = vcmask 1045504
  %v300 = vsel %vm298, %v272, 0
  %302 = vmatprep.subr.bf16.mxu0 0
  %303 = vmatpush1.bf16.msra.mxu0 0
  %304 = vmatprep.subr.bf16.mxu0 0
  %305 = vmatpush1.bf16.msra.mxu0 0
  %306 = vmatprep.subr.bf16.mxu0 0
  %307 = vmatpush1.bf16.msra.mxu0 0
  %308 = vmatprep.subr.bf16.mxu0 0
  %309 = vmatpush1.bf16.msra.mxu0 0
  %310 = vmatprep.subr.bf16.mxu0 0
  %311 = vmatpush1.bf16.msra.mxu0 0
  %312 = vmatprep.subr.bf16.mxu0 0
  %313 = vmatpush1.bf16.msra.mxu0 0
  %314 = vmatprep.subr.bf16.mxu0 0
  %315 = vmatpush1.bf16.msra.mxu0 0
  %316 = vmatprep.subr.bf16.mxu0 0
  %317 = vmatpush1.bf16.msra.mxu0 %v300
  %318 = vmatprep.subr.bf16.mxu0 0
  %319 = vmatpush2.bf16.msra.mxu0 0
  %320 = vmatprep.subr.bf16.mxu0 0
  %321 = vmatpush2.bf16.msra.mxu0 0
  %322 = vmatprep.subr.bf16.mxu0 0
  %323 = vmatpush2.bf16.msra.mxu0 0
  %324 = vmatprep.subr.bf16.mxu0 0
  %325 = vmatpush2.bf16.msra.mxu0 0
  %326 = vmatprep.subr.bf16.mxu0 0
  %327 = vmatpush2.bf16.msra.mxu0 0
  %328 = vmatprep.subr.bf16.mxu0 0
  %329 = vmatpush2.bf16.msra.mxu0 0
  %330 = vmatprep.subr.bf16.mxu0 0
  %331 = vmatpush2.bf16.msra.mxu0 0
  %332 = vmatprep.subr.bf16.mxu0 0
  %333 = vmatpush2.bf16.msra.mxu0 0
  %334 = vmatprep.mubr.bf16.mxu0 0
  %335 = vmatmul.mubr.bf16.gmra.mxu0 %v275
  %v336 = vpop.f32.mrf.mxu0
  %v337 = vadd.f32 %v166, %v336
  %v338 = vpop.f32.mrf.mxu0
  %v339 = vpop.f32.mrf.mxu0
  %v340 = vadd.f32 %v169, %v339
  %v341 = vpop.f32.mrf.mxu0
  %342 = vmatprep.mubr.bf16.mxu0 0
  %343 = vmatmul.mubr.bf16.gmra.mxu0 %v278
  %v344 = vpop.f32.mrf.mxu0
  %v345 = vadd.f32 %v174, %v344
  %v346 = vpop.f32.mrf.mxu0
  %v347 = vpop.f32.mrf.mxu0
  %v348 = vadd.f32 %v177, %v347
  %v349 = vpop.f32.mrf.mxu0
  %350 = vmatprep.mubr.bf16.mxu0 0
  %351 = vmatmul.mubr.bf16.gmra.mxu0 %v281
  %v352 = vpop.f32.mrf.mxu0
  %v353 = vadd.f32 %v182, %v352
  %v354 = vpop.f32.mrf.mxu0
  %v355 = vpop.f32.mrf.mxu0
  %v356 = vadd.f32 %v185, %v355
  %v357 = vpop.f32.mrf.mxu0
  %358 = vmatprep.mubr.bf16.mxu0 0
  %359 = vmatmul.mubr.bf16.gmra.mxu0 %v284
  %v360 = vpop.f32.mrf.mxu0
  %v361 = vadd.f32 %v190, %v360
  %v362 = vpop.f32.mrf.mxu0
  %v363 = vpop.f32.mrf.mxu0
  %v364 = vadd.f32 %v193, %v363
  %v365 = vpop.f32.mrf.mxu0
  %366 = vmatprep.mubr.bf16.mxu0 0
  %367 = vmatmul.mubr.bf16.gmra.mxu0 %v287
  %v368 = vpop.f32.mrf.mxu0
  %v369 = vadd.f32 %v198, %v368
  %v370 = vpop.f32.mrf.mxu0
  %v371 = vpop.f32.mrf.mxu0
  %v372 = vadd.f32 %v201, %v371
  %v373 = vpop.f32.mrf.mxu0
  %374 = vmatprep.mubr.bf16.mxu0 0
  %375 = vmatmul.mubr.bf16.gmra.mxu0 %v290
  %v376 = vpop.f32.mrf.mxu0
  %v377 = vadd.f32 %v206, %v376
  %v378 = vpop.f32.mrf.mxu0
  %v379 = vpop.f32.mrf.mxu0
  %v380 = vadd.f32 %v209, %v379
  %v381 = vpop.f32.mrf.mxu0
  %382 = vmatprep.mubr.bf16.mxu0 0
  %383 = vmatmul.mubr.bf16.gmra.mxu0 %v293
  %v384 = vpop.f32.mrf.mxu0
  %v385 = vadd.f32 %v214, %v384
  %v386 = vpop.f32.mrf.mxu0
  %v387 = vpop.f32.mrf.mxu0
  %v388 = vadd.f32 %v217, %v387
  %v389 = vpop.f32.mrf.mxu0
  %390 = vmatprep.mubr.bf16.mxu0 0
  %391 = vmatmul.mubr.bf16.gmra.mxu0 %v296
  %v392 = vpop.f32.mrf.mxu0
  %v393 = vadd.f32 %v222, %v392
  %v394 = vpop.f32.mrf.mxu0
  %v395 = vpop.f32.mrf.mxu0
  %v396 = vadd.f32 %v225, %v395
  %v397 = vpop.f32.mrf.mxu0
  %398 = vdwg.mxu0
  %v399 = vld [vmem:[%s4] sm:$0xff]
  %v400 = vld [vmem:[%s4 + $0x8] sm:$0xff]
  %v401 = vld [vmem:[%s4 + $0x10] sm:$0xff]
  %v402 = vld [vmem:[%s4 + $0x18] sm:$0xff]
  %v403 = vld [vmem:[%s4 + $0x20] sm:$0xff]
  %v404 = vld [vmem:[%s4 + $0x28] sm:$0xff]
  %v405 = vld [vmem:[%s4 + $0x30] sm:$0xff]
  %v406 = vld [vmem:[%s4 + $0x38] sm:$0xff]
  %v407 = vld [vmem:[%s4 + $0x40] sm:$0xff]
  %v408 = vld [vmem:[%s4 + $0x48] sm:$0xff]
  %v409 = vld [vmem:[%s4 + $0x50] sm:$0xff]
  %v410 = vld [vmem:[%s4 + $0x58] sm:$0xff]
  %v411 = vld [vmem:[%s4 + $0x60] sm:$0xff]
  %v412 = vld [vmem:[%s4 + $0x68] sm:$0xff]
  %v413 = vld [vmem:[%s4 + $0x70] sm:$0xff]
  %v414 = vld [vmem:[%s4 + $0x78] sm:$0xff]
  %416 = vset.pattern.permute.xlu0 0
  %417 = vperm.xlu0 %416, %v399
  %v418 = vpop.permute.xlu0 %417
  %421 = vset.pattern.permute.xlu0 0
  %422 = vperm.xlu0 %421, %v400
  %v423 = vpop.permute.xlu0 %422
  %426 = vset.pattern.permute.xlu0 0
  %427 = vperm.xlu0 %426, %v401
  %v428 = vpop.permute.xlu0 %427
  %431 = vset.pattern.permute.xlu0 0
  %432 = vperm.xlu0 %431, %v402
  %v433 = vpop.permute.xlu0 %432
  %436 = vset.pattern.permute.xlu0 0
  %437 = vperm.xlu0 %436, %v403
  %v438 = vpop.permute.xlu0 %437
  %441 = vset.pattern.permute.xlu0 0
  %442 = vperm.xlu0 %441, %v404
  %v443 = vpop.permute.xlu0 %442
  %446 = vset.pattern.permute.xlu0 0
  %447 = vperm.xlu0 %446, %v405
  %v448 = vpop.permute.xlu0 %447
  %451 = vset.pattern.permute.xlu0 0
  %452 = vperm.xlu0 %451, %v406
  %v453 = vpop.permute.xlu0 %452
  %456 = vset.pattern.permute.xlu0 0
  %457 = vperm.xlu0 %456, %v407
  %v458 = vpop.permute.xlu0 %457
  %461 = vset.pattern.permute.xlu0 0
  %462 = vperm.xlu0 %461, %v408
  %v463 = vpop.permute.xlu0 %462
  %466 = vset.pattern.permute.xlu0 0
  %467 = vperm.xlu0 %466, %v409
  %v468 = vpop.permute.xlu0 %467
  %471 = vset.pattern.permute.xlu0 0
  %472 = vperm.xlu0 %471, %v410
  %v473 = vpop.permute.xlu0 %472
  %476 = vset.pattern.permute.xlu0 0
  %477 = vperm.xlu0 %476, %v411
  %v478 = vpop.permute.xlu0 %477
  %481 = vset.pattern.permute.xlu0 0
  %482 = vperm.xlu0 %481, %v412
  %v483 = vpop.permute.xlu0 %482
  %486 = vset.pattern.permute.xlu0 0
  %487 = vperm.xlu0 %486, %v413
  %v488 = vpop.permute.xlu0 %487
  %491 = vset.pattern.permute.xlu0 0
  %492 = vperm.xlu0 %491, %v414
  %v493 = vpop.permute.xlu0 %492
  %v495 = vadd.f32 %v337, %v418
  %v496 = vadd.f32 %v340, %v423
  %v497 = vadd.f32 %v345, %v428
  %v498 = vadd.f32 %v348, %v433
  %v499 = vadd.f32 %v353, %v438
  %v500 = vadd.f32 %v356, %v443
  %v501 = vadd.f32 %v361, %v448
  %v502 = vadd.f32 %v364, %v453
  %v503 = vadd.f32 %v369, %v458
  %v504 = vadd.f32 %v372, %v463
  %v505 = vadd.f32 %v377, %v468
  %v506 = vadd.f32 %v380, %v473
  %v507 = vadd.f32 %v385, %v478
  %v508 = vadd.f32 %v388, %v483
  %v509 = vadd.f32 %v393, %v488
  %v510 = vadd.f32 %v396, %v493
  %v511 = vand.u32 2147483647, %v495
  %vm512 = vcmp.le.f32.partialorder %v511, 0.7853982
  %vm513 = vcmp.lt.s32.totalorder %v495, 0
  %v514 = vand.u32 %v495, 2139095040
  %v515 = vshrl.u32 %v514, 23
  %v516 = vsub.s32 %v515, 127
  %v517 = vand.u32 2147483647, %v495
  %v518 = vand.u32 %v517, 8388607
  %v519 = vor.u32 %v518, 8388608
  %v520 = vsub.s32 0, %v519
  %v521 = vadd.s32 %v516, 1
  %vm522 = vcmp.gt.s32.totalorder %v521, 0
  %v523 = vsel %vm522, %v521, 0
  %v524 = vshrl.u32 %v523, 5
  %v525 = vand.u32 %v523, 31
  %v526 = vsub.s32 32, %v525
  %v527 = vshrl.u32 683565275, %v526
  %v528 = vshll.u32 683565275, %v525
  %v529 = vshrl.u32 2475754826, %v526
  %v530 = vor.u32 %v528, %v529
  %v531 = vshll.u32 2475754826, %v525
  %v532 = vshrl.u32 2131351028, %v526
  %v533 = vor.u32 %v531, %v532
  %v534 = vshll.u32 2131351028, %v525
  %v535 = vshrl.u32 2102212464, %v526
  %v536 = vor.u32 %v534, %v535
  %v537 = vshll.u32 2102212464, %v525
  %v538 = vshrl.u32 920167782, %v526
  %v539 = vor.u32 %v537, %v538
  %v540 = vshll.u32 920167782, %v525
  %v541 = vshrl.u32 1326507024, %v526
  %v542 = vor.u32 %v540, %v541
  %vm543 = vcmp.lt.s32.totalorder %v524, 1
  %vm544 = vcmp.lt.s32.totalorder %v524, 2
  %vm545 = vcmp.lt.s32.totalorder %v524, 3
  %vm546 = vcmp.lt.s32.totalorder %v524, 4
  %v547 = vsel %vm543, %v527, %v530
  %v548 = vsel %vm546, %v536, 2102212464
  %v549 = vsel %vm545, %v533, %v548
  %v550 = vsel %vm544, %v547, %v549
  %v551 = vsel %vm543, %v530, %v533
  %v552 = vsel %vm546, %v539, 920167782
  %v553 = vsel %vm545, %v536, %v552
  %v554 = vsel %vm544, %v551, %v553
  %v555 = vsel %vm543, %v533, %v536
  %v556 = vsel %vm546, %v542, 1326507024
  %v557 = vsel %vm545, %v539, %v556
  %v558 = vsel %vm544, %v555, %v557
  %v559 = vshll.u32 %v519, 8
  %v560 = vmul.u32.u64.compose %v559, %v558
  %v561 = vextract.low.u32 %v560
  %v562 = vextract.high.u32 %v560
  %v563 = vmul.u32.u64.compose %v559, %v554
  %v564 = vextract.low.u32 %v563
  %v565 = vextract.high.u32 %v563
  %v566 = vmul.u32 %v559, %v550
  %v567 = vadd.s32 %v562, %v564
  %vm568 = vc.u32 %v562, %v564
  %v569 = vadd.s32 %v565, 1
  %v570 = vsel %vm568, %v569, %v565
  %v571 = vadd.s32 %v566, %v570
  %v572 = vadd.s32 %v571, 536870912
  %v573 = vshrl.u32 %v572, 30
  %v574 = vshll.u32 %v573, 30
  %v575 = vsub.s32 %v571, %v574
  %vm576 = vcmp.lt.s32.totalorder %v575, 0
  %v577 = vsub.s32 0, %v575
  %v578 = vsel %vm576, %v577, %v575
  %v579 = vclz %v578
  %v580 = vsub.s32 %v579, 2
  %vm581 = vcmp.gt.s32.totalorder 0, %v580
  %v582 = vsel %vm581, 0, %v580
  %v583 = vsub.s32 32, %v582
  %v584 = vshll.u32 %v575, %v582
  %v585 = vshrl.u32 %v567, %v583
  %v586 = vor.u32 %v584, %v585
  %v587 = vsub.s32 4294967266, %v582
  %v588 = vadd.s32 %v587, 127
  %v589 = vshll.u32 %v588, 23
  %v590 = vor.u32 4788187, %v589
  %v591 = vand.u32 2147483647, %v590
  %v593 = vcvt.s32.f32 %v586
  %v594 = vmul.f32 %v593, %v591
  %v595 = vxor.u32 %v594, 2147483648
  %v596 = vsel %vm513, %v595, %v594
  %v597 = vsub.s32 4, %v573
  %v598 = vsel %vm513, %v597, %v573
  %v599 = vsel %vm512, %v495, %v596
  %v600 = vsel %vm512, 0, %v598
  %v601 = vcosq.f32.pop %v599
  %v602 = vsinq.f32.pop %v599
  %vm603 = vweird.f32 %v495
  %v604 = vadd.s32 %v600, 3
  %v605 = vand.u32 %v604, 3
  %vm606 = vcmp.lt.s32.totalorder %v605, 2
  %vm607 = vcmp.eq.s32.totalorder %v605, 0
  %v608 = vxor.u32 %v602, 2147483648
  %v609 = vsel %vm607, %v601, %v608
  %vm610 = vcmp.eq.s32.totalorder %v605, 2
  %v611 = vxor.u32 %v601, 2147483648
  %v612 = vsel %vm610, %v611, %v602
  %v613 = vsel %vm606, %v609, %v612
  %v614 = vsel %vm603, nan, %v613
  %v615 = vand.u32 2147483647, %v496
  %vm616 = vcmp.le.f32.partialorder %v615, 0.7853982
  %vm617 = vcmp.lt.s32.totalorder %v496, 0
  %v618 = vand.u32 %v496, 2139095040
  %v619 = vshrl.u32 %v618, 23
  %v620 = vsub.s32 %v619, 127
  %v621 = vand.u32 2147483647, %v496
  %v622 = vand.u32 %v621, 8388607
  %v623 = vor.u32 %v622, 8388608
  %v624 = vsub.s32 0, %v623
  %v625 = vadd.s32 %v620, 1
  %vm626 = vcmp.gt.s32.totalorder %v625, 0
  %v627 = vsel %vm626, %v625, 0
  %v628 = vshrl.u32 %v627, 5
  %v629 = vand.u32 %v627, 31
  %v630 = vsub.s32 32, %v629
  %v631 = vshrl.u32 683565275, %v630
  %v632 = vshll.u32 683565275, %v629
  %v633 = vshrl.u32 2475754826, %v630
  %v634 = vor.u32 %v632, %v633
  %v635 = vshll.u32 2475754826, %v629
  %v636 = vshrl.u32 2131351028, %v630
  %v637 = vor.u32 %v635, %v636
  %v638 = vshll.u32 2131351028, %v629
  %v639 = vshrl.u32 2102212464, %v630
  %v640 = vor.u32 %v638, %v639
  %v641 = vshll.u32 2102212464, %v629
  %v642 = vshrl.u32 920167782, %v630
  %v643 = vor.u32 %v641, %v642
  %v644 = vshll.u32 920167782, %v629
  %v645 = vshrl.u32 1326507024, %v630
  %v646 = vor.u32 %v644, %v645
  %vm647 = vcmp.lt.s32.totalorder %v628, 1
  %vm648 = vcmp.lt.s32.totalorder %v628, 2
  %vm649 = vcmp.lt.s32.totalorder %v628, 3
  %vm650 = vcmp.lt.s32.totalorder %v628, 4
  %v651 = vsel %vm647, %v631, %v634
  %v652 = vsel %vm650, %v640, 2102212464
  %v653 = vsel %vm649, %v637, %v652
  %v654 = vsel %vm648, %v651, %v653
  %v655 = vsel %vm647, %v634, %v637
  %v656 = vsel %vm650, %v643, 920167782
  %v657 = vsel %vm649, %v640, %v656
  %v658 = vsel %vm648, %v655, %v657
  %v659 = vsel %vm647, %v637, %v640
  %v660 = vsel %vm650, %v646, 1326507024
  %v661 = vsel %vm649, %v643, %v660
  %v662 = vsel %vm648, %v659, %v661
  %v663 = vshll.u32 %v623, 8
  %v664 = vmul.u32.u64.compose %v663, %v662
  %v665 = vextract.low.u32 %v664
  %v666 = vextract.high.u32 %v664
  %v667 = vmul.u32.u64.compose %v663, %v658
  %v668 = vextract.low.u32 %v667
  %v669 = vextract.high.u32 %v667
  %v670 = vmul.u32 %v663, %v654
  %v671 = vadd.s32 %v666, %v668
  %vm672 = vc.u32 %v666, %v668
  %v673 = vadd.s32 %v669, 1
  %v674 = vsel %vm672, %v673, %v669
  %v675 = vadd.s32 %v670, %v674
  %v676 = vadd.s32 %v675, 536870912
  %v677 = vshrl.u32 %v676, 30
  %v678 = vshll.u32 %v677, 30
  %v679 = vsub.s32 %v675, %v678
  %vm680 = vcmp.lt.s32.totalorder %v679, 0
  %v681 = vsub.s32 0, %v679
  %v682 = vsel %vm680, %v681, %v679
  %v683 = vclz %v682
  %v684 = vsub.s32 %v683, 2
  %vm685 = vcmp.gt.s32.totalorder 0, %v684
  %v686 = vsel %vm685, 0, %v684
  %v687 = vsub.s32 32, %v686
  %v688 = vshll.u32 %v679, %v686
  %v689 = vshrl.u32 %v671, %v687
  %v690 = vor.u32 %v688, %v689
  %v691 = vsub.s32 4294967266, %v686
  %v692 = vadd.s32 %v691, 127
  %v693 = vshll.u32 %v692, 23
  %v694 = vor.u32 4788187, %v693
  %v695 = vand.u32 2147483647, %v694
  %v697 = vcvt.s32.f32 %v690
  %v698 = vmul.f32 %v697, %v695
  %v699 = vxor.u32 %v698, 2147483648
  %v700 = vsel %vm617, %v699, %v698
  %v701 = vsub.s32 4, %v677
  %v702 = vsel %vm617, %v701, %v677
  %v703 = vsel %vm616, %v496, %v700
  %v704 = vsel %vm616, 0, %v702
  %v705 = vcosq.f32.pop %v703
  %v706 = vsinq.f32.pop %v703
  %vm707 = vweird.f32 %v496
  %v708 = vadd.s32 %v704, 3
  %v709 = vand.u32 %v708, 3
  %vm710 = vcmp.lt.s32.totalorder %v709, 2
  %vm711 = vcmp.eq.s32.totalorder %v709, 0
  %v712 = vxor.u32 %v706, 2147483648
  %v713 = vsel %vm711, %v705, %v712
  %vm714 = vcmp.eq.s32.totalorder %v709, 2
  %v715 = vxor.u32 %v705, 2147483648
  %v716 = vsel %vm714, %v715, %v706
  %v717 = vsel %vm710, %v713, %v716
  %v718 = vsel %vm707, nan, %v717
  %v719 = vand.u32 2147483647, %v497
  %vm720 = vcmp.le.f32.partialorder %v719, 0.7853982
  %vm721 = vcmp.lt.s32.totalorder %v497, 0
  %v722 = vand.u32 %v497, 2139095040
  %v723 = vshrl.u32 %v722, 23
  %v724 = vsub.s32 %v723, 127
  %v725 = vand.u32 2147483647, %v497
  %v726 = vand.u32 %v725, 8388607
  %v727 = vor.u32 %v726, 8388608
  %v728 = vsub.s32 0, %v727
  %v729 = vadd.s32 %v724, 1
  %vm730 = vcmp.gt.s32.totalorder %v729, 0
  %v731 = vsel %vm730, %v729, 0
  %v732 = vshrl.u32 %v731, 5
  %v733 = vand.u32 %v731, 31
  %v734 = vsub.s32 32, %v733
  %v735 = vshrl.u32 683565275, %v734
  %v736 = vshll.u32 683565275, %v733
  %v737 = vshrl.u32 2475754826, %v734
  %v738 = vor.u32 %v736, %v737
  %v739 = vshll.u32 2475754826, %v733
  %v740 = vshrl.u32 2131351028, %v734
  %v741 = vor.u32 %v739, %v740
  %v742 = vshll.u32 2131351028, %v733
  %v743 = vshrl.u32 2102212464, %v734
  %v744 = vor.u32 %v742, %v743
  %v745 = vshll.u32 2102212464, %v733
  %v746 = vshrl.u32 920167782, %v734
  %v747 = vor.u32 %v745, %v746
  %v748 = vshll.u32 920167782, %v733
  %v749 = vshrl.u32 1326507024, %v734
  %v750 = vor.u32 %v748, %v749
  %vm751 = vcmp.lt.s32.totalorder %v732, 1
  %vm752 = vcmp.lt.s32.totalorder %v732, 2
  %vm753 = vcmp.lt.s32.totalorder %v732, 3
  %vm754 = vcmp.lt.s32.totalorder %v732, 4
  %v755 = vsel %vm751, %v735, %v738
  %v756 = vsel %vm754, %v744, 2102212464
  %v757 = vsel %vm753, %v741, %v756
  %v758 = vsel %vm752, %v755, %v757
  %v759 = vsel %vm751, %v738, %v741
  %v760 = vsel %vm754, %v747, 920167782
  %v761 = vsel %vm753, %v744, %v760
  %v762 = vsel %vm752, %v759, %v761
  %v763 = vsel %vm751, %v741, %v744
  %v764 = vsel %vm754, %v750, 1326507024
  %v765 = vsel %vm753, %v747, %v764
  %v766 = vsel %vm752, %v763, %v765
  %v767 = vshll.u32 %v727, 8
  %v768 = vmul.u32.u64.compose %v767, %v766
  %v769 = vextract.low.u32 %v768
  %v770 = vextract.high.u32 %v768
  %v771 = vmul.u32.u64.compose %v767, %v762
  %v772 = vextract.low.u32 %v771
  %v773 = vextract.high.u32 %v771
  %v774 = vmul.u32 %v767, %v758
  %v775 = vadd.s32 %v770, %v772
  %vm776 = vc.u32 %v770, %v772
  %v777 = vadd.s32 %v773, 1
  %v778 = vsel %vm776, %v777, %v773
  %v779 = vadd.s32 %v774, %v778
  %v780 = vadd.s32 %v779, 536870912
  %v781 = vshrl.u32 %v780, 30
  %v782 = vshll.u32 %v781, 30
  %v783 = vsub.s32 %v779, %v782
  %vm784 = vcmp.lt.s32.totalorder %v783, 0
  %v785 = vsub.s32 0, %v783
  %v786 = vsel %vm784, %v785, %v783
  %v787 = vclz %v786
  %v788 = vsub.s32 %v787, 2
  %vm789 = vcmp.gt.s32.totalorder 0, %v788
  %v790 = vsel %vm789, 0, %v788
  %v791 = vsub.s32 32, %v790
  %v792 = vshll.u32 %v783, %v790
  %v793 = vshrl.u32 %v775, %v791
  %v794 = vor.u32 %v792, %v793
  %v795 = vsub.s32 4294967266, %v790
  %v796 = vadd.s32 %v795, 127
  %v797 = vshll.u32 %v796, 23
  %v798 = vor.u32 4788187, %v797
  %v799 = vand.u32 2147483647, %v798
  %v801 = vcvt.s32.f32 %v794
  %v802 = vmul.f32 %v801, %v799
  %v803 = vxor.u32 %v802, 2147483648
  %v804 = vsel %vm721, %v803, %v802
  %v805 = vsub.s32 4, %v781
  %v806 = vsel %vm721, %v805, %v781
  %v807 = vsel %vm720, %v497, %v804
  %v808 = vsel %vm720, 0, %v806
  %v809 = vcosq.f32.pop %v807
  %v810 = vsinq.f32.pop %v807
  %vm811 = vweird.f32 %v497
  %v812 = vadd.s32 %v808, 3
  %v813 = vand.u32 %v812, 3
  %vm814 = vcmp.lt.s32.totalorder %v813, 2
  %vm815 = vcmp.eq.s32.totalorder %v813, 0
  %v816 = vxor.u32 %v810, 2147483648
  %v817 = vsel %vm815, %v809, %v816
  %vm818 = vcmp.eq.s32.totalorder %v813, 2
  %v819 = vxor.u32 %v809, 2147483648
  %v820 = vsel %vm818, %v819, %v810
  %v821 = vsel %vm814, %v817, %v820
  %v822 = vsel %vm811, nan, %v821
  %v823 = vand.u32 2147483647, %v498
  %vm824 = vcmp.le.f32.partialorder %v823, 0.7853982
  %vm825 = vcmp.lt.s32.totalorder %v498, 0
  %v826 = vand.u32 %v498, 2139095040
  %v827 = vshrl.u32 %v826, 23
  %v828 = vsub.s32 %v827, 127
  %v829 = vand.u32 2147483647, %v498
  %v830 = vand.u32 %v829, 8388607
  %v831 = vor.u32 %v830, 8388608
  %v832 = vsub.s32 0, %v831
  %v833 = vadd.s32 %v828, 1
  %vm834 = vcmp.gt.s32.totalorder %v833, 0
  %v835 = vsel %vm834, %v833, 0
  %v836 = vshrl.u32 %v835, 5
  %v837 = vand.u32 %v835, 31
  %v838 = vsub.s32 32, %v837
  %v839 = vshrl.u32 683565275, %v838
  %v840 = vshll.u32 683565275, %v837
  %v841 = vshrl.u32 2475754826, %v838
  %v842 = vor.u32 %v840, %v841
  %v843 = vshll.u32 2475754826, %v837
  %v844 = vshrl.u32 2131351028, %v838
  %v845 = vor.u32 %v843, %v844
  %v846 = vshll.u32 2131351028, %v837
  %v847 = vshrl.u32 2102212464, %v838
  %v848 = vor.u32 %v846, %v847
  %v849 = vshll.u32 2102212464, %v837
  %v850 = vshrl.u32 920167782, %v838
  %v851 = vor.u32 %v849, %v850
  %v852 = vshll.u32 920167782, %v837
  %v853 = vshrl.u32 1326507024, %v838
  %v854 = vor.u32 %v852, %v853
  %vm855 = vcmp.lt.s32.totalorder %v836, 1
  %vm856 = vcmp.lt.s32.totalorder %v836, 2
  %vm857 = vcmp.lt.s32.totalorder %v836, 3
  %vm858 = vcmp.lt.s32.totalorder %v836, 4
  %v859 = vsel %vm855, %v839, %v842
  %v860 = vsel %vm858, %v848, 2102212464
  %v861 = vsel %vm857, %v845, %v860
  %v862 = vsel %vm856, %v859, %v861
  %v863 = vsel %vm855, %v842, %v845
  %v864 = vsel %vm858, %v851, 920167782
  %v865 = vsel %vm857, %v848, %v864
  %v866 = vsel %vm856, %v863, %v865
  %v867 = vsel %vm855, %v845, %v848
  %v868 = vsel %vm858, %v854, 1326507024
  %v869 = vsel %vm857, %v851, %v868
  %v870 = vsel %vm856, %v867, %v869
  %v871 = vshll.u32 %v831, 8
  %v872 = vmul.u32.u64.compose %v871, %v870
  %v873 = vextract.low.u32 %v872
  %v874 = vextract.high.u32 %v872
  %v875 = vmul.u32.u64.compose %v871, %v866
  %v876 = vextract.low.u32 %v875
  %v877 = vextract.high.u32 %v875
  %v878 = vmul.u32 %v871, %v862
  %v879 = vadd.s32 %v874, %v876
  %vm880 = vc.u32 %v874, %v876
  %v881 = vadd.s32 %v877, 1
  %v882 = vsel %vm880, %v881, %v877
  %v883 = vadd.s32 %v878, %v882
  %v884 = vadd.s32 %v883, 536870912
  %v885 = vshrl.u32 %v884, 30
  %v886 = vshll.u32 %v885, 30
  %v887 = vsub.s32 %v883, %v886
  %vm888 = vcmp.lt.s32.totalorder %v887, 0
  %v889 = vsub.s32 0, %v887
  %v890 = vsel %vm888, %v889, %v887
  %v891 = vclz %v890
  %v892 = vsub.s32 %v891, 2
  %vm893 = vcmp.gt.s32.totalorder 0, %v892
  %v894 = vsel %vm893, 0, %v892
  %v895 = vsub.s32 32, %v894
  %v896 = vshll.u32 %v887, %v894
  %v897 = vshrl.u32 %v879, %v895
  %v898 = vor.u32 %v896, %v897
  %v899 = vsub.s32 4294967266, %v894
  %v900 = vadd.s32 %v899, 127
  %v901 = vshll.u32 %v900, 23
  %v902 = vor.u32 4788187, %v901
  %v903 = vand.u32 2147483647, %v902
  %v905 = vcvt.s32.f32 %v898
  %v906 = vmul.f32 %v905, %v903
  %v907 = vxor.u32 %v906, 2147483648
  %v908 = vsel %vm825, %v907, %v906
  %v909 = vsub.s32 4, %v885
  %v910 = vsel %vm825, %v909, %v885
  %v911 = vsel %vm824, %v498, %v908
  %v912 = vsel %vm824, 0, %v910
  %v913 = vcosq.f32.pop %v911
  %v914 = vsinq.f32.pop %v911
  %vm915 = vweird.f32 %v498
  %v916 = vadd.s32 %v912, 3
  %v917 = vand.u32 %v916, 3
  %vm918 = vcmp.lt.s32.totalorder %v917, 2
  %vm919 = vcmp.eq.s32.totalorder %v917, 0
  %v920 = vxor.u32 %v914, 2147483648
  %v921 = vsel %vm919, %v913, %v920
  %vm922 = vcmp.eq.s32.totalorder %v917, 2
  %v923 = vxor.u32 %v913, 2147483648
  %v924 = vsel %vm922, %v923, %v914
  %v925 = vsel %vm918, %v921, %v924
  %v926 = vsel %vm915, nan, %v925
  %v927 = vand.u32 2147483647, %v499
  %vm928 = vcmp.le.f32.partialorder %v927, 0.7853982
  %vm929 = vcmp.lt.s32.totalorder %v499, 0
  %v930 = vand.u32 %v499, 2139095040
  %v931 = vshrl.u32 %v930, 23
  %v932 = vsub.s32 %v931, 127
  %v933 = vand.u32 2147483647, %v499
  %v934 = vand.u32 %v933, 8388607
  %v935 = vor.u32 %v934, 8388608
  %v936 = vsub.s32 0, %v935
  %v937 = vadd.s32 %v932, 1
  %vm938 = vcmp.gt.s32.totalorder %v937, 0
  %v939 = vsel %vm938, %v937, 0
  %v940 = vshrl.u32 %v939, 5
  %v941 = vand.u32 %v939, 31
  %v942 = vsub.s32 32, %v941
  %v943 = vshrl.u32 683565275, %v942
  %v944 = vshll.u32 683565275, %v941
  %v945 = vshrl.u32 2475754826, %v942
  %v946 = vor.u32 %v944, %v945
  %v947 = vshll.u32 2475754826, %v941
  %v948 = vshrl.u32 2131351028, %v942
  %v949 = vor.u32 %v947, %v948
  %v950 = vshll.u32 2131351028, %v941
  %v951 = vshrl.u32 2102212464, %v942
  %v952 = vor.u32 %v950, %v951
  %v953 = vshll.u32 2102212464, %v941
  %v954 = vshrl.u32 920167782, %v942
  %v955 = vor.u32 %v953, %v954
  %v956 = vshll.u32 920167782, %v941
  %v957 = vshrl.u32 1326507024, %v942
  %v958 = vor.u32 %v956, %v957
  %vm959 = vcmp.lt.s32.totalorder %v940, 1
  %vm960 = vcmp.lt.s32.totalorder %v940, 2
  %vm961 = vcmp.lt.s32.totalorder %v940, 3
  %vm962 = vcmp.lt.s32.totalorder %v940, 4
  %v963 = vsel %vm959, %v943, %v946
  %v964 = vsel %vm962, %v952, 2102212464
  %v965 = vsel %vm961, %v949, %v964
  %v966 = vsel %vm960, %v963, %v965
  %v967 = vsel %vm959, %v946, %v949
  %v968 = vsel %vm962, %v955, 920167782
  %v969 = vsel %vm961, %v952, %v968
  %v970 = vsel %vm960, %v967, %v969
  %v971 = vsel %vm959, %v949, %v952
  %v972 = vsel %vm962, %v958, 1326507024
  %v973 = vsel %vm961, %v955, %v972
  %v974 = vsel %vm960, %v971, %v973
  %v975 = vshll.u32 %v935, 8
  %v976 = vmul.u32.u64.compose %v975, %v974
  %v977 = vextract.low.u32 %v976
  %v978 = vextract.high.u32 %v976
  %v979 = vmul.u32.u64.compose %v975, %v970
  %v980 = vextract.low.u32 %v979
  %v981 = vextract.high.u32 %v979
  %v982 = vmul.u32 %v975, %v966
  %v983 = vadd.s32 %v978, %v980
  %vm984 = vc.u32 %v978, %v980
  %v985 = vadd.s32 %v981, 1
  %v986 = vsel %vm984, %v985, %v981
  %v987 = vadd.s32 %v982, %v986
  %v988 = vadd.s32 %v987, 536870912
  %v989 = vshrl.u32 %v988, 30
  %v990 = vshll.u32 %v989, 30
  %v991 = vsub.s32 %v987, %v990
  %vm992 = vcmp.lt.s32.totalorder %v991, 0
  %v993 = vsub.s32 0, %v991
  %v994 = vsel %vm992, %v993, %v991
  %v995 = vclz %v994
  %v996 = vsub.s32 %v995, 2
  %vm997 = vcmp.gt.s32.totalorder 0, %v996
  %v998 = vsel %vm997, 0, %v996
  %v999 = vsub.s32 32, %v998
  %v1000 = vshll.u32 %v991, %v998
  %v1001 = vshrl.u32 %v983, %v999
  %v1002 = vor.u32 %v1000, %v1001
  %v1003 = vsub.s32 4294967266, %v998
  %v1004 = vadd.s32 %v1003, 127
  %v1005 = vshll.u32 %v1004, 23
  %v1006 = vor.u32 4788187, %v1005
  %v1007 = vand.u32 2147483647, %v1006
  %v1009 = vcvt.s32.f32 %v1002
  %v1010 = vmul.f32 %v1009, %v1007
  %v1011 = vxor.u32 %v1010, 2147483648
  %v1012 = vsel %vm929, %v1011, %v1010
  %v1013 = vsub.s32 4, %v989
  %v1014 = vsel %vm929, %v1013, %v989
  %v1015 = vsel %vm928, %v499, %v1012
  %v1016 = vsel %vm928, 0, %v1014
  %v1017 = vcosq.f32.pop %v1015
  %v1018 = vsinq.f32.pop %v1015
  %vm1019 = vweird.f32 %v499
  %v1020 = vadd.s32 %v1016, 3
  %v1021 = vand.u32 %v1020, 3
  %vm1022 = vcmp.lt.s32.totalorder %v1021, 2
  %vm1023 = vcmp.eq.s32.totalorder %v1021, 0
  %v1024 = vxor.u32 %v1018, 2147483648
  %v1025 = vsel %vm1023, %v1017, %v1024
  %vm1026 = vcmp.eq.s32.totalorder %v1021, 2
  %v1027 = vxor.u32 %v1017, 2147483648
  %v1028 = vsel %vm1026, %v1027, %v1018
  %v1029 = vsel %vm1022, %v1025, %v1028
  %v1030 = vsel %vm1019, nan, %v1029
  %v1031 = vand.u32 2147483647, %v500
  %vm1032 = vcmp.le.f32.partialorder %v1031, 0.7853982
  %vm1033 = vcmp.lt.s32.totalorder %v500, 0
  %v1034 = vand.u32 %v500, 2139095040
  %v1035 = vshrl.u32 %v1034, 23
  %v1036 = vsub.s32 %v1035, 127
  %v1037 = vand.u32 2147483647, %v500
  %v1038 = vand.u32 %v1037, 8388607
  %v1039 = vor.u32 %v1038, 8388608
  %v1040 = vsub.s32 0, %v1039
  %v1041 = vadd.s32 %v1036, 1
  %vm1042 = vcmp.gt.s32.totalorder %v1041, 0
  %v1043 = vsel %vm1042, %v1041, 0
  %v1044 = vshrl.u32 %v1043, 5
  %v1045 = vand.u32 %v1043, 31
  %v1046 = vsub.s32 32, %v1045
  %v1047 = vshrl.u32 683565275, %v1046
  %v1048 = vshll.u32 683565275, %v1045
  %v1049 = vshrl.u32 2475754826, %v1046
  %v1050 = vor.u32 %v1048, %v1049
  %v1051 = vshll.u32 2475754826, %v1045
  %v1052 = vshrl.u32 2131351028, %v1046
  %v1053 = vor.u32 %v1051, %v1052
  %v1054 = vshll.u32 2131351028, %v1045
  %v1055 = vshrl.u32 2102212464, %v1046
  %v1056 = vor.u32 %v1054, %v1055
  %v1057 = vshll.u32 2102212464, %v1045
  %v1058 = vshrl.u32 920167782, %v1046
  %v1059 = vor.u32 %v1057, %v1058
  %v1060 = vshll.u32 920167782, %v1045
  %v1061 = vshrl.u32 1326507024, %v1046
  %v1062 = vor.u32 %v1060, %v1061
  %vm1063 = vcmp.lt.s32.totalorder %v1044, 1
  %vm1064 = vcmp.lt.s32.totalorder %v1044, 2
  %vm1065 = vcmp.lt.s32.totalorder %v1044, 3
  %vm1066 = vcmp.lt.s32.totalorder %v1044, 4
  %v1067 = vsel %vm1063, %v1047, %v1050
  %v1068 = vsel %vm1066, %v1056, 2102212464
  %v1069 = vsel %vm1065, %v1053, %v1068
  %v1070 = vsel %vm1064, %v1067, %v1069
  %v1071 = vsel %vm1063, %v1050, %v1053
  %v1072 = vsel %vm1066, %v1059, 920167782
  %v1073 = vsel %vm1065, %v1056, %v1072
  %v1074 = vsel %vm1064, %v1071, %v1073
  %v1075 = vsel %vm1063, %v1053, %v1056
  %v1076 = vsel %vm1066, %v1062, 1326507024
  %v1077 = vsel %vm1065, %v1059, %v1076
  %v1078 = vsel %vm1064, %v1075, %v1077
  %v1079 = vshll.u32 %v1039, 8
  %v1080 = vmul.u32.u64.compose %v1079, %v1078
  %v1081 = vextract.low.u32 %v1080
  %v1082 = vextract.high.u32 %v1080
  %v1083 = vmul.u32.u64.compose %v1079, %v1074
  %v1084 = vextract.low.u32 %v1083
  %v1085 = vextract.high.u32 %v1083
  %v1086 = vmul.u32 %v1079, %v1070
  %v1087 = vadd.s32 %v1082, %v1084
  %vm1088 = vc.u32 %v1082, %v1084
  %v1089 = vadd.s32 %v1085, 1
  %v1090 = vsel %vm1088, %v1089, %v1085
  %v1091 = vadd.s32 %v1086, %v1090
  %v1092 = vadd.s32 %v1091, 536870912
  %v1093 = vshrl.u32 %v1092, 30
  %v1094 = vshll.u32 %v1093, 30
  %v1095 = vsub.s32 %v1091, %v1094
  %vm1096 = vcmp.lt.s32.totalorder %v1095, 0
  %v1097 = vsub.s32 0, %v1095
  %v1098 = vsel %vm1096, %v1097, %v1095
  %v1099 = vclz %v1098
  %v1100 = vsub.s32 %v1099, 2
  %vm1101 = vcmp.gt.s32.totalorder 0, %v1100
  %v1102 = vsel %vm1101, 0, %v1100
  %v1103 = vsub.s32 32, %v1102
  %v1104 = vshll.u32 %v1095, %v1102
  %v1105 = vshrl.u32 %v1087, %v1103
  %v1106 = vor.u32 %v1104, %v1105
  %v1107 = vsub.s32 4294967266, %v1102
  %v1108 = vadd.s32 %v1107, 127
  %v1109 = vshll.u32 %v1108, 23
  %v1110 = vor.u32 4788187, %v1109
  %v1111 = vand.u32 2147483647, %v1110
  %v1113 = vcvt.s32.f32 %v1106
  %v1114 = vmul.f32 %v1113, %v1111
  %v1115 = vxor.u32 %v1114, 2147483648
  %v1116 = vsel %vm1033, %v1115, %v1114
  %v1117 = vsub.s32 4, %v1093
  %v1118 = vsel %vm1033, %v1117, %v1093
  %v1119 = vsel %vm1032, %v500, %v1116
  %v1120 = vsel %vm1032, 0, %v1118
  %v1121 = vcosq.f32.pop %v1119
  %v1122 = vsinq.f32.pop %v1119
  %vm1123 = vweird.f32 %v500
  %v1124 = vadd.s32 %v1120, 3
  %v1125 = vand.u32 %v1124, 3
  %vm1126 = vcmp.lt.s32.totalorder %v1125, 2
  %vm1127 = vcmp.eq.s32.totalorder %v1125, 0
  %v1128 = vxor.u32 %v1122, 2147483648
  %v1129 = vsel %vm1127, %v1121, %v1128
  %vm1130 = vcmp.eq.s32.totalorder %v1125, 2
  %v1131 = vxor.u32 %v1121, 2147483648
  %v1132 = vsel %vm1130, %v1131, %v1122
  %v1133 = vsel %vm1126, %v1129, %v1132
  %v1134 = vsel %vm1123, nan, %v1133
  %v1135 = vand.u32 2147483647, %v501
  %vm1136 = vcmp.le.f32.partialorder %v1135, 0.7853982
  %vm1137 = vcmp.lt.s32.totalorder %v501, 0
  %v1138 = vand.u32 %v501, 2139095040
  %v1139 = vshrl.u32 %v1138, 23
  %v1140 = vsub.s32 %v1139, 127
  %v1141 = vand.u32 2147483647, %v501
  %v1142 = vand.u32 %v1141, 8388607
  %v1143 = vor.u32 %v1142, 8388608
  %v1144 = vsub.s32 0, %v1143
  %v1145 = vadd.s32 %v1140, 1
  %vm1146 = vcmp.gt.s32.totalorder %v1145, 0
  %v1147 = vsel %vm1146, %v1145, 0
  %v1148 = vshrl.u32 %v1147, 5
  %v1149 = vand.u32 %v1147, 31
  %v1150 = vsub.s32 32, %v1149
  %v1151 = vshrl.u32 683565275, %v1150
  %v1152 = vshll.u32 683565275, %v1149
  %v1153 = vshrl.u32 2475754826, %v1150
  %v1154 = vor.u32 %v1152, %v1153
  %v1155 = vshll.u32 2475754826, %v1149
  %v1156 = vshrl.u32 2131351028, %v1150
  %v1157 = vor.u32 %v1155, %v1156
  %v1158 = vshll.u32 2131351028, %v1149
  %v1159 = vshrl.u32 2102212464, %v1150
  %v1160 = vor.u32 %v1158, %v1159
  %v1161 = vshll.u32 2102212464, %v1149
  %v1162 = vshrl.u32 920167782, %v1150
  %v1163 = vor.u32 %v1161, %v1162
  %v1164 = vshll.u32 920167782, %v1149
  %v1165 = vshrl.u32 1326507024, %v1150
  %v1166 = vor.u32 %v1164, %v1165
  %vm1167 = vcmp.lt.s32.totalorder %v1148, 1
  %vm1168 = vcmp.lt.s32.totalorder %v1148, 2
  %vm1169 = vcmp.lt.s32.totalorder %v1148, 3
  %vm1170 = vcmp.lt.s32.totalorder %v1148, 4
  %v1171 = vsel %vm1167, %v1151, %v1154
  %v1172 = vsel %vm1170, %v1160, 2102212464
  %v1173 = vsel %vm1169, %v1157, %v1172
  %v1174 = vsel %vm1168, %v1171, %v1173
  %v1175 = vsel %vm1167, %v1154, %v1157
  %v1176 = vsel %vm1170, %v1163, 920167782
  %v1177 = vsel %vm1169, %v1160, %v1176
  %v1178 = vsel %vm1168, %v1175, %v1177
  %v1179 = vsel %vm1167, %v1157, %v1160
  %v1180 = vsel %vm1170, %v1166, 1326507024
  %v1181 = vsel %vm1169, %v1163, %v1180
  %v1182 = vsel %vm1168, %v1179, %v1181
  %v1183 = vshll.u32 %v1143, 8
  %v1184 = vmul.u32.u64.compose %v1183, %v1182
  %v1185 = vextract.low.u32 %v1184
  %v1186 = vextract.high.u32 %v1184
  %v1187 = vmul.u32.u64.compose %v1183, %v1178
  %v1188 = vextract.low.u32 %v1187
  %v1189 = vextract.high.u32 %v1187
  %v1190 = vmul.u32 %v1183, %v1174
  %v1191 = vadd.s32 %v1186, %v1188
  %vm1192 = vc.u32 %v1186, %v1188
  %v1193 = vadd.s32 %v1189, 1
  %v1194 = vsel %vm1192, %v1193, %v1189
  %v1195 = vadd.s32 %v1190, %v1194
  %v1196 = vadd.s32 %v1195, 536870912
  %v1197 = vshrl.u32 %v1196, 30
  %v1198 = vshll.u32 %v1197, 30
  %v1199 = vsub.s32 %v1195, %v1198
  %vm1200 = vcmp.lt.s32.totalorder %v1199, 0
  %v1201 = vsub.s32 0, %v1199
  %v1202 = vsel %vm1200, %v1201, %v1199
  %v1203 = vclz %v1202
  %v1204 = vsub.s32 %v1203, 2
  %vm1205 = vcmp.gt.s32.totalorder 0, %v1204
  %v1206 = vsel %vm1205, 0, %v1204
  %v1207 = vsub.s32 32, %v1206
  %v1208 = vshll.u32 %v1199, %v1206
  %v1209 = vshrl.u32 %v1191, %v1207
  %v1210 = vor.u32 %v1208, %v1209
  %v1211 = vsub.s32 4294967266, %v1206
  %v1212 = vadd.s32 %v1211, 127
  %v1213 = vshll.u32 %v1212, 23
  %v1214 = vor.u32 4788187, %v1213
  %v1215 = vand.u32 2147483647, %v1214
  %v1217 = vcvt.s32.f32 %v1210
  %v1218 = vmul.f32 %v1217, %v1215
  %v1219 = vxor.u32 %v1218, 2147483648
  %v1220 = vsel %vm1137, %v1219, %v1218
  %v1221 = vsub.s32 4, %v1197
  %v1222 = vsel %vm1137, %v1221, %v1197
  %v1223 = vsel %vm1136, %v501, %v1220
  %v1224 = vsel %vm1136, 0, %v1222
  %v1225 = vcosq.f32.pop %v1223
  %v1226 = vsinq.f32.pop %v1223
  %vm1227 = vweird.f32 %v501
  %v1228 = vadd.s32 %v1224, 3
  %v1229 = vand.u32 %v1228, 3
  %vm1230 = vcmp.lt.s32.totalorder %v1229, 2
  %vm1231 = vcmp.eq.s32.totalorder %v1229, 0
  %v1232 = vxor.u32 %v1226, 2147483648
  %v1233 = vsel %vm1231, %v1225, %v1232
  %vm1234 = vcmp.eq.s32.totalorder %v1229, 2
  %v1235 = vxor.u32 %v1225, 2147483648
  %v1236 = vsel %vm1234, %v1235, %v1226
  %v1237 = vsel %vm1230, %v1233, %v1236
  %v1238 = vsel %vm1227, nan, %v1237
  %v1239 = vand.u32 2147483647, %v502
  %vm1240 = vcmp.le.f32.partialorder %v1239, 0.7853982
  %vm1241 = vcmp.lt.s32.totalorder %v502, 0
  %v1242 = vand.u32 %v502, 2139095040
  %v1243 = vshrl.u32 %v1242, 23
  %v1244 = vsub.s32 %v1243, 127
  %v1245 = vand.u32 2147483647, %v502
  %v1246 = vand.u32 %v1245, 8388607
  %v1247 = vor.u32 %v1246, 8388608
  %v1248 = vsub.s32 0, %v1247
  %v1249 = vadd.s32 %v1244, 1
  %vm1250 = vcmp.gt.s32.totalorder %v1249, 0
  %v1251 = vsel %vm1250, %v1249, 0
  %v1252 = vshrl.u32 %v1251, 5
  %v1253 = vand.u32 %v1251, 31
  %v1254 = vsub.s32 32, %v1253
  %v1255 = vshrl.u32 683565275, %v1254
  %v1256 = vshll.u32 683565275, %v1253
  %v1257 = vshrl.u32 2475754826, %v1254
  %v1258 = vor.u32 %v1256, %v1257
  %v1259 = vshll.u32 2475754826, %v1253
  %v1260 = vshrl.u32 2131351028, %v1254
  %v1261 = vor.u32 %v1259, %v1260
  %v1262 = vshll.u32 2131351028, %v1253
  %v1263 = vshrl.u32 2102212464, %v1254
  %v1264 = vor.u32 %v1262, %v1263
  %v1265 = vshll.u32 2102212464, %v1253
  %v1266 = vshrl.u32 920167782, %v1254
  %v1267 = vor.u32 %v1265, %v1266
  %v1268 = vshll.u32 920167782, %v1253
  %v1269 = vshrl.u32 1326507024, %v1254
  %v1270 = vor.u32 %v1268, %v1269
  %vm1271 = vcmp.lt.s32.totalorder %v1252, 1
  %vm1272 = vcmp.lt.s32.totalorder %v1252, 2
  %vm1273 = vcmp.lt.s32.totalorder %v1252, 3
  %vm1274 = vcmp.lt.s32.totalorder %v1252, 4
  %v1275 = vsel %vm1271, %v1255, %v1258
  %v1276 = vsel %vm1274, %v1264, 2102212464
  %v1277 = vsel %vm1273, %v1261, %v1276
  %v1278 = vsel %vm1272, %v1275, %v1277
  %v1279 = vsel %vm1271, %v1258, %v1261
  %v1280 = vsel %vm1274, %v1267, 920167782
  %v1281 = vsel %vm1273, %v1264, %v1280
  %v1282 = vsel %vm1272, %v1279, %v1281
  %v1283 = vsel %vm1271, %v1261, %v1264
  %v1284 = vsel %vm1274, %v1270, 1326507024
  %v1285 = vsel %vm1273, %v1267, %v1284
  %v1286 = vsel %vm1272, %v1283, %v1285
  %v1287 = vshll.u32 %v1247, 8
  %v1288 = vmul.u32.u64.compose %v1287, %v1286
  %v1289 = vextract.low.u32 %v1288
  %v1290 = vextract.high.u32 %v1288
  %v1291 = vmul.u32.u64.compose %v1287, %v1282
  %v1292 = vextract.low.u32 %v1291
  %v1293 = vextract.high.u32 %v1291
  %v1294 = vmul.u32 %v1287, %v1278
  %v1295 = vadd.s32 %v1290, %v1292
  %vm1296 = vc.u32 %v1290, %v1292
  %v1297 = vadd.s32 %v1293, 1
  %v1298 = vsel %vm1296, %v1297, %v1293
  %v1299 = vadd.s32 %v1294, %v1298
  %v1300 = vadd.s32 %v1299, 536870912
  %v1301 = vshrl.u32 %v1300, 30
  %v1302 = vshll.u32 %v1301, 30
  %v1303 = vsub.s32 %v1299, %v1302
  %vm1304 = vcmp.lt.s32.totalorder %v1303, 0
  %v1305 = vsub.s32 0, %v1303
  %v1306 = vsel %vm1304, %v1305, %v1303
  %v1307 = vclz %v1306
  %v1308 = vsub.s32 %v1307, 2
  %vm1309 = vcmp.gt.s32.totalorder 0, %v1308
  %v1310 = vsel %vm1309, 0, %v1308
  %v1311 = vsub.s32 32, %v1310
  %v1312 = vshll.u32 %v1303, %v1310
  %v1313 = vshrl.u32 %v1295, %v1311
  %v1314 = vor.u32 %v1312, %v1313
  %v1315 = vsub.s32 4294967266, %v1310
  %v1316 = vadd.s32 %v1315, 127
  %v1317 = vshll.u32 %v1316, 23
  %v1318 = vor.u32 4788187, %v1317
  %v1319 = vand.u32 2147483647, %v1318
  %v1321 = vcvt.s32.f32 %v1314
  %v1322 = vmul.f32 %v1321, %v1319
  %v1323 = vxor.u32 %v1322, 2147483648
  %v1324 = vsel %vm1241, %v1323, %v1322
  %v1325 = vsub.s32 4, %v1301
  %v1326 = vsel %vm1241, %v1325, %v1301
  %v1327 = vsel %vm1240, %v502, %v1324
  %v1328 = vsel %vm1240, 0, %v1326
  %v1329 = vcosq.f32.pop %v1327
  %v1330 = vsinq.f32.pop %v1327
  %vm1331 = vweird.f32 %v502
  %v1332 = vadd.s32 %v1328, 3
  %v1333 = vand.u32 %v1332, 3
  %vm1334 = vcmp.lt.s32.totalorder %v1333, 2
  %vm1335 = vcmp.eq.s32.totalorder %v1333, 0
  %v1336 = vxor.u32 %v1330, 2147483648
  %v1337 = vsel %vm1335, %v1329, %v1336
  %vm1338 = vcmp.eq.s32.totalorder %v1333, 2
  %v1339 = vxor.u32 %v1329, 2147483648
  %v1340 = vsel %vm1338, %v1339, %v1330
  %v1341 = vsel %vm1334, %v1337, %v1340
  %v1342 = vsel %vm1331, nan, %v1341
  %v1343 = vand.u32 2147483647, %v503
  %vm1344 = vcmp.le.f32.partialorder %v1343, 0.7853982
  %vm1345 = vcmp.lt.s32.totalorder %v503, 0
  %v1346 = vand.u32 %v503, 2139095040
  %v1347 = vshrl.u32 %v1346, 23
  %v1348 = vsub.s32 %v1347, 127
  %v1349 = vand.u32 2147483647, %v503
  %v1350 = vand.u32 %v1349, 8388607
  %v1351 = vor.u32 %v1350, 8388608
  %v1352 = vsub.s32 0, %v1351
  %v1353 = vadd.s32 %v1348, 1
  %vm1354 = vcmp.gt.s32.totalorder %v1353, 0
  %v1355 = vsel %vm1354, %v1353, 0
  %v1356 = vshrl.u32 %v1355, 5
  %v1357 = vand.u32 %v1355, 31
  %v1358 = vsub.s32 32, %v1357
  %v1359 = vshrl.u32 683565275, %v1358
  %v1360 = vshll.u32 683565275, %v1357
  %v1361 = vshrl.u32 2475754826, %v1358
  %v1362 = vor.u32 %v1360, %v1361
  %v1363 = vshll.u32 2475754826, %v1357
  %v1364 = vshrl.u32 2131351028, %v1358
  %v1365 = vor.u32 %v1363, %v1364
  %v1366 = vshll.u32 2131351028, %v1357
  %v1367 = vshrl.u32 2102212464, %v1358
  %v1368 = vor.u32 %v1366, %v1367
  %v1369 = vshll.u32 2102212464, %v1357
  %v1370 = vshrl.u32 920167782, %v1358
  %v1371 = vor.u32 %v1369, %v1370
  %v1372 = vshll.u32 920167782, %v1357
  %v1373 = vshrl.u32 1326507024, %v1358
  %v1374 = vor.u32 %v1372, %v1373
  %vm1375 = vcmp.lt.s32.totalorder %v1356, 1
  %vm1376 = vcmp.lt.s32.totalorder %v1356, 2
  %vm1377 = vcmp.lt.s32.totalorder %v1356, 3
  %vm1378 = vcmp.lt.s32.totalorder %v1356, 4
  %v1379 = vsel %vm1375, %v1359, %v1362
  %v1380 = vsel %vm1378, %v1368, 2102212464
  %v1381 = vsel %vm1377, %v1365, %v1380
  %v1382 = vsel %vm1376, %v1379, %v1381
  %v1383 = vsel %vm1375, %v1362, %v1365
  %v1384 = vsel %vm1378, %v1371, 920167782
  %v1385 = vsel %vm1377, %v1368, %v1384
  %v1386 = vsel %vm1376, %v1383, %v1385
  %v1387 = vsel %vm1375, %v1365, %v1368
  %v1388 = vsel %vm1378, %v1374, 1326507024
  %v1389 = vsel %vm1377, %v1371, %v1388
  %v1390 = vsel %vm1376, %v1387, %v1389
  %v1391 = vshll.u32 %v1351, 8
  %v1392 = vmul.u32.u64.compose %v1391, %v1390
  %v1393 = vextract.low.u32 %v1392
  %v1394 = vextract.high.u32 %v1392
  %v1395 = vmul.u32.u64.compose %v1391, %v1386
  %v1396 = vextract.low.u32 %v1395
  %v1397 = vextract.high.u32 %v1395
  %v1398 = vmul.u32 %v1391, %v1382
  %v1399 = vadd.s32 %v1394, %v1396
  %vm1400 = vc.u32 %v1394, %v1396
  %v1401 = vadd.s32 %v1397, 1
  %v1402 = vsel %vm1400, %v1401, %v1397
  %v1403 = vadd.s32 %v1398, %v1402
  %v1404 = vadd.s32 %v1403, 536870912
  %v1405 = vshrl.u32 %v1404, 30
  %v1406 = vshll.u32 %v1405, 30
  %v1407 = vsub.s32 %v1403, %v1406
  %vm1408 = vcmp.lt.s32.totalorder %v1407, 0
  %v1409 = vsub.s32 0, %v1407
  %v1410 = vsel %vm1408, %v1409, %v1407
  %v1411 = vclz %v1410
  %v1412 = vsub.s32 %v1411, 2
  %vm1413 = vcmp.gt.s32.totalorder 0, %v1412
  %v1414 = vsel %vm1413, 0, %v1412
  %v1415 = vsub.s32 32, %v1414
  %v1416 = vshll.u32 %v1407, %v1414
  %v1417 = vshrl.u32 %v1399, %v1415
  %v1418 = vor.u32 %v1416, %v1417
  %v1419 = vsub.s32 4294967266, %v1414
  %v1420 = vadd.s32 %v1419, 127
  %v1421 = vshll.u32 %v1420, 23
  %v1422 = vor.u32 4788187, %v1421
  %v1423 = vand.u32 2147483647, %v1422
  %v1425 = vcvt.s32.f32 %v1418
  %v1426 = vmul.f32 %v1425, %v1423
  %v1427 = vxor.u32 %v1426, 2147483648
  %v1428 = vsel %vm1345, %v1427, %v1426
  %v1429 = vsub.s32 4, %v1405
  %v1430 = vsel %vm1345, %v1429, %v1405
  %v1431 = vsel %vm1344, %v503, %v1428
  %v1432 = vsel %vm1344, 0, %v1430
  %v1433 = vcosq.f32.pop %v1431
  %v1434 = vsinq.f32.pop %v1431
  %vm1435 = vweird.f32 %v503
  %v1436 = vadd.s32 %v1432, 3
  %v1437 = vand.u32 %v1436, 3
  %vm1438 = vcmp.lt.s32.totalorder %v1437, 2
  %vm1439 = vcmp.eq.s32.totalorder %v1437, 0
  %v1440 = vxor.u32 %v1434, 2147483648
  %v1441 = vsel %vm1439, %v1433, %v1440
  %vm1442 = vcmp.eq.s32.totalorder %v1437, 2
  %v1443 = vxor.u32 %v1433, 2147483648
  %v1444 = vsel %vm1442, %v1443, %v1434
  %v1445 = vsel %vm1438, %v1441, %v1444
  %v1446 = vsel %vm1435, nan, %v1445
  %v1447 = vand.u32 2147483647, %v504
  %vm1448 = vcmp.le.f32.partialorder %v1447, 0.7853982
  %vm1449 = vcmp.lt.s32.totalorder %v504, 0
  %v1450 = vand.u32 %v504, 2139095040
  %v1451 = vshrl.u32 %v1450, 23
  %v1452 = vsub.s32 %v1451, 127
  %v1453 = vand.u32 2147483647, %v504
  %v1454 = vand.u32 %v1453, 8388607
  %v1455 = vor.u32 %v1454, 8388608
  %v1456 = vsub.s32 0, %v1455
  %v1457 = vadd.s32 %v1452, 1
  %vm1458 = vcmp.gt.s32.totalorder %v1457, 0
  %v1459 = vsel %vm1458, %v1457, 0
  %v1460 = vshrl.u32 %v1459, 5
  %v1461 = vand.u32 %v1459, 31
  %v1462 = vsub.s32 32, %v1461
  %v1463 = vshrl.u32 683565275, %v1462
  %v1464 = vshll.u32 683565275, %v1461
  %v1465 = vshrl.u32 2475754826, %v1462
  %v1466 = vor.u32 %v1464, %v1465
  %v1467 = vshll.u32 2475754826, %v1461
  %v1468 = vshrl.u32 2131351028, %v1462
  %v1469 = vor.u32 %v1467, %v1468
  %v1470 = vshll.u32 2131351028, %v1461
  %v1471 = vshrl.u32 2102212464, %v1462
  %v1472 = vor.u32 %v1470, %v1471
  %v1473 = vshll.u32 2102212464, %v1461
  %v1474 = vshrl.u32 920167782, %v1462
  %v1475 = vor.u32 %v1473, %v1474
  %v1476 = vshll.u32 920167782, %v1461
  %v1477 = vshrl.u32 1326507024, %v1462
  %v1478 = vor.u32 %v1476, %v1477
  %vm1479 = vcmp.lt.s32.totalorder %v1460, 1
  %vm1480 = vcmp.lt.s32.totalorder %v1460, 2
  %vm1481 = vcmp.lt.s32.totalorder %v1460, 3
  %vm1482 = vcmp.lt.s32.totalorder %v1460, 4
  %v1483 = vsel %vm1479, %v1463, %v1466
  %v1484 = vsel %vm1482, %v1472, 2102212464
  %v1485 = vsel %vm1481, %v1469, %v1484
  %v1486 = vsel %vm1480, %v1483, %v1485
  %v1487 = vsel %vm1479, %v1466, %v1469
  %v1488 = vsel %vm1482, %v1475, 920167782
  %v1489 = vsel %vm1481, %v1472, %v1488
  %v1490 = vsel %vm1480, %v1487, %v1489
  %v1491 = vsel %vm1479, %v1469, %v1472
  %v1492 = vsel %vm1482, %v1478, 1326507024
  %v1493 = vsel %vm1481, %v1475, %v1492
  %v1494 = vsel %vm1480, %v1491, %v1493
  %v1495 = vshll.u32 %v1455, 8
  %v1496 = vmul.u32.u64.compose %v1495, %v1494
  %v1497 = vextract.low.u32 %v1496
  %v1498 = vextract.high.u32 %v1496
  %v1499 = vmul.u32.u64.compose %v1495, %v1490
  %v1500 = vextract.low.u32 %v1499
  %v1501 = vextract.high.u32 %v1499
  %v1502 = vmul.u32 %v1495, %v1486
  %v1503 = vadd.s32 %v1498, %v1500
  %vm1504 = vc.u32 %v1498, %v1500
  %v1505 = vadd.s32 %v1501, 1
  %v1506 = vsel %vm1504, %v1505, %v1501
  %v1507 = vadd.s32 %v1502, %v1506
  %v1508 = vadd.s32 %v1507, 536870912
  %v1509 = vshrl.u32 %v1508, 30
  %v1510 = vshll.u32 %v1509, 30
  %v1511 = vsub.s32 %v1507, %v1510
  %vm1512 = vcmp.lt.s32.totalorder %v1511, 0
  %v1513 = vsub.s32 0, %v1511
  %v1514 = vsel %vm1512, %v1513, %v1511
  %v1515 = vclz %v1514
  %v1516 = vsub.s32 %v1515, 2
  %vm1517 = vcmp.gt.s32.totalorder 0, %v1516
  %v1518 = vsel %vm1517, 0, %v1516
  %v1519 = vsub.s32 32, %v1518
  %v1520 = vshll.u32 %v1511, %v1518
  %v1521 = vshrl.u32 %v1503, %v1519
  %v1522 = vor.u32 %v1520, %v1521
  %v1523 = vsub.s32 4294967266, %v1518
  %v1524 = vadd.s32 %v1523, 127
  %v1525 = vshll.u32 %v1524, 23
  %v1526 = vor.u32 4788187, %v1525
  %v1527 = vand.u32 2147483647, %v1526
  %v1529 = vcvt.s32.f32 %v1522
  %v1530 = vmul.f32 %v1529, %v1527
  %v1531 = vxor.u32 %v1530, 2147483648
  %v1532 = vsel %vm1449, %v1531, %v1530
  %v1533 = vsub.s32 4, %v1509
  %v1534 = vsel %vm1449, %v1533, %v1509
  %v1535 = vsel %vm1448, %v504, %v1532
  %v1536 = vsel %vm1448, 0, %v1534
  %v1537 = vcosq.f32.pop %v1535
  %v1538 = vsinq.f32.pop %v1535
  %vm1539 = vweird.f32 %v504
  %v1540 = vadd.s32 %v1536, 3
  %v1541 = vand.u32 %v1540, 3
  %vm1542 = vcmp.lt.s32.totalorder %v1541, 2
  %vm1543 = vcmp.eq.s32.totalorder %v1541, 0
  %v1544 = vxor.u32 %v1538, 2147483648
  %v1545 = vsel %vm1543, %v1537, %v1544
  %vm1546 = vcmp.eq.s32.totalorder %v1541, 2
  %v1547 = vxor.u32 %v1537, 2147483648
  %v1548 = vsel %vm1546, %v1547, %v1538
  %v1549 = vsel %vm1542, %v1545, %v1548
  %v1550 = vsel %vm1539, nan, %v1549
  %v1551 = vand.u32 2147483647, %v505
  %vm1552 = vcmp.le.f32.partialorder %v1551, 0.7853982
  %vm1553 = vcmp.lt.s32.totalorder %v505, 0
  %v1554 = vand.u32 %v505, 2139095040
  %v1555 = vshrl.u32 %v1554, 23
  %v1556 = vsub.s32 %v1555, 127
  %v1557 = vand.u32 2147483647, %v505
  %v1558 = vand.u32 %v1557, 8388607
  %v1559 = vor.u32 %v1558, 8388608
  %v1560 = vsub.s32 0, %v1559
  %v1561 = vadd.s32 %v1556, 1
  %vm1562 = vcmp.gt.s32.totalorder %v1561, 0
  %v1563 = vsel %vm1562, %v1561, 0
  %v1564 = vshrl.u32 %v1563, 5
  %v1565 = vand.u32 %v1563, 31
  %v1566 = vsub.s32 32, %v1565
  %v1567 = vshrl.u32 683565275, %v1566
  %v1568 = vshll.u32 683565275, %v1565
  %v1569 = vshrl.u32 2475754826, %v1566
  %v1570 = vor.u32 %v1568, %v1569
  %v1571 = vshll.u32 2475754826, %v1565
  %v1572 = vshrl.u32 2131351028, %v1566
  %v1573 = vor.u32 %v1571, %v1572
  %v1574 = vshll.u32 2131351028, %v1565
  %v1575 = vshrl.u32 2102212464, %v1566
  %v1576 = vor.u32 %v1574, %v1575
  %v1577 = vshll.u32 2102212464, %v1565
  %v1578 = vshrl.u32 920167782, %v1566
  %v1579 = vor.u32 %v1577, %v1578
  %v1580 = vshll.u32 920167782, %v1565
  %v1581 = vshrl.u32 1326507024, %v1566
  %v1582 = vor.u32 %v1580, %v1581
  %vm1583 = vcmp.lt.s32.totalorder %v1564, 1
  %vm1584 = vcmp.lt.s32.totalorder %v1564, 2
  %vm1585 = vcmp.lt.s32.totalorder %v1564, 3
  %vm1586 = vcmp.lt.s32.totalorder %v1564, 4
  %v1587 = vsel %vm1583, %v1567, %v1570
  %v1588 = vsel %vm1586, %v1576, 2102212464
  %v1589 = vsel %vm1585, %v1573, %v1588
  %v1590 = vsel %vm1584, %v1587, %v1589
  %v1591 = vsel %vm1583, %v1570, %v1573
  %v1592 = vsel %vm1586, %v1579, 920167782
  %v1593 = vsel %vm1585, %v1576, %v1592
  %v1594 = vsel %vm1584, %v1591, %v1593
  %v1595 = vsel %vm1583, %v1573, %v1576
  %v1596 = vsel %vm1586, %v1582, 1326507024
  %v1597 = vsel %vm1585, %v1579, %v1596
  %v1598 = vsel %vm1584, %v1595, %v1597
  %v1599 = vshll.u32 %v1559, 8
  %v1600 = vmul.u32.u64.compose %v1599, %v1598
  %v1601 = vextract.low.u32 %v1600
  %v1602 = vextract.high.u32 %v1600
  %v1603 = vmul.u32.u64.compose %v1599, %v1594
  %v1604 = vextract.low.u32 %v1603
  %v1605 = vextract.high.u32 %v1603
  %v1606 = vmul.u32 %v1599, %v1590
  %v1607 = vadd.s32 %v1602, %v1604
  %vm1608 = vc.u32 %v1602, %v1604
  %v1609 = vadd.s32 %v1605, 1
  %v1610 = vsel %vm1608, %v1609, %v1605
  %v1611 = vadd.s32 %v1606, %v1610
  %v1612 = vadd.s32 %v1611, 536870912
  %v1613 = vshrl.u32 %v1612, 30
  %v1614 = vshll.u32 %v1613, 30
  %v1615 = vsub.s32 %v1611, %v1614
  %vm1616 = vcmp.lt.s32.totalorder %v1615, 0
  %v1617 = vsub.s32 0, %v1615
  %v1618 = vsel %vm1616, %v1617, %v1615
  %v1619 = vclz %v1618
  %v1620 = vsub.s32 %v1619, 2
  %vm1621 = vcmp.gt.s32.totalorder 0, %v1620
  %v1622 = vsel %vm1621, 0, %v1620
  %v1623 = vsub.s32 32, %v1622
  %v1624 = vshll.u32 %v1615, %v1622
  %v1625 = vshrl.u32 %v1607, %v1623
  %v1626 = vor.u32 %v1624, %v1625
  %v1627 = vsub.s32 4294967266, %v1622
  %v1628 = vadd.s32 %v1627, 127
  %v1629 = vshll.u32 %v1628, 23
  %v1630 = vor.u32 4788187, %v1629
  %v1631 = vand.u32 2147483647, %v1630
  %v1633 = vcvt.s32.f32 %v1626
  %v1634 = vmul.f32 %v1633, %v1631
  %v1635 = vxor.u32 %v1634, 2147483648
  %v1636 = vsel %vm1553, %v1635, %v1634
  %v1637 = vsub.s32 4, %v1613
  %v1638 = vsel %vm1553, %v1637, %v1613
  %v1639 = vsel %vm1552, %v505, %v1636
  %v1640 = vsel %vm1552, 0, %v1638
  %v1641 = vcosq.f32.pop %v1639
  %v1642 = vsinq.f32.pop %v1639
  %vm1643 = vweird.f32 %v505
  %v1644 = vadd.s32 %v1640, 3
  %v1645 = vand.u32 %v1644, 3
  %vm1646 = vcmp.lt.s32.totalorder %v1645, 2
  %vm1647 = vcmp.eq.s32.totalorder %v1645, 0
  %v1648 = vxor.u32 %v1642, 2147483648
  %v1649 = vsel %vm1647, %v1641, %v1648
  %vm1650 = vcmp.eq.s32.totalorder %v1645, 2
  %v1651 = vxor.u32 %v1641, 2147483648
  %v1652 = vsel %vm1650, %v1651, %v1642
  %v1653 = vsel %vm1646, %v1649, %v1652
  %v1654 = vsel %vm1643, nan, %v1653
  %v1655 = vand.u32 2147483647, %v506
  %vm1656 = vcmp.le.f32.partialorder %v1655, 0.7853982
  %vm1657 = vcmp.lt.s32.totalorder %v506, 0
  %v1658 = vand.u32 %v506, 2139095040
  %v1659 = vshrl.u32 %v1658, 23
  %v1660 = vsub.s32 %v1659, 127
  %v1661 = vand.u32 2147483647, %v506
  %v1662 = vand.u32 %v1661, 8388607
  %v1663 = vor.u32 %v1662, 8388608
  %v1664 = vsub.s32 0, %v1663
  %v1665 = vadd.s32 %v1660, 1
  %vm1666 = vcmp.gt.s32.totalorder %v1665, 0
  %v1667 = vsel %vm1666, %v1665, 0
  %v1668 = vshrl.u32 %v1667, 5
  %v1669 = vand.u32 %v1667, 31
  %v1670 = vsub.s32 32, %v1669
  %v1671 = vshrl.u32 683565275, %v1670
  %v1672 = vshll.u32 683565275, %v1669
  %v1673 = vshrl.u32 2475754826, %v1670
  %v1674 = vor.u32 %v1672, %v1673
  %v1675 = vshll.u32 2475754826, %v1669
  %v1676 = vshrl.u32 2131351028, %v1670
  %v1677 = vor.u32 %v1675, %v1676
  %v1678 = vshll.u32 2131351028, %v1669
  %v1679 = vshrl.u32 2102212464, %v1670
  %v1680 = vor.u32 %v1678, %v1679
  %v1681 = vshll.u32 2102212464, %v1669
  %v1682 = vshrl.u32 920167782, %v1670
  %v1683 = vor.u32 %v1681, %v1682
  %v1684 = vshll.u32 920167782, %v1669
  %v1685 = vshrl.u32 1326507024, %v1670
  %v1686 = vor.u32 %v1684, %v1685
  %vm1687 = vcmp.lt.s32.totalorder %v1668, 1
  %vm1688 = vcmp.lt.s32.totalorder %v1668, 2
  %vm1689 = vcmp.lt.s32.totalorder %v1668, 3
  %vm1690 = vcmp.lt.s32.totalorder %v1668, 4
  %v1691 = vsel %vm1687, %v1671, %v1674
  %v1692 = vsel %vm1690, %v1680, 2102212464
  %v1693 = vsel %vm1689, %v1677, %v1692
  %v1694 = vsel %vm1688, %v1691, %v1693
  %v1695 = vsel %vm1687, %v1674, %v1677
  %v1696 = vsel %vm1690, %v1683, 920167782
  %v1697 = vsel %vm1689, %v1680, %v1696
  %v1698 = vsel %vm1688, %v1695, %v1697
  %v1699 = vsel %vm1687, %v1677, %v1680
  %v1700 = vsel %vm1690, %v1686, 1326507024
  %v1701 = vsel %vm1689, %v1683, %v1700
  %v1702 = vsel %vm1688, %v1699, %v1701
  %v1703 = vshll.u32 %v1663, 8
  %v1704 = vmul.u32.u64.compose %v1703, %v1702
  %v1705 = vextract.low.u32 %v1704
  %v1706 = vextract.high.u32 %v1704
  %v1707 = vmul.u32.u64.compose %v1703, %v1698
  %v1708 = vextract.low.u32 %v1707
  %v1709 = vextract.high.u32 %v1707
  %v1710 = vmul.u32 %v1703, %v1694
  %v1711 = vadd.s32 %v1706, %v1708
  %vm1712 = vc.u32 %v1706, %v1708
  %v1713 = vadd.s32 %v1709, 1
  %v1714 = vsel %vm1712, %v1713, %v1709
  %v1715 = vadd.s32 %v1710, %v1714
  %v1716 = vadd.s32 %v1715, 536870912
  %v1717 = vshrl.u32 %v1716, 30
  %v1718 = vshll.u32 %v1717, 30
  %v1719 = vsub.s32 %v1715, %v1718
  %vm1720 = vcmp.lt.s32.totalorder %v1719, 0
  %v1721 = vsub.s32 0, %v1719
  %v1722 = vsel %vm1720, %v1721, %v1719
  %v1723 = vclz %v1722
  %v1724 = vsub.s32 %v1723, 2
  %vm1725 = vcmp.gt.s32.totalorder 0, %v1724
  %v1726 = vsel %vm1725, 0, %v1724
  %v1727 = vsub.s32 32, %v1726
  %v1728 = vshll.u32 %v1719, %v1726
  %v1729 = vshrl.u32 %v1711, %v1727
  %v1730 = vor.u32 %v1728, %v1729
  %v1731 = vsub.s32 4294967266, %v1726
  %v1732 = vadd.s32 %v1731, 127
  %v1733 = vshll.u32 %v1732, 23
  %v1734 = vor.u32 4788187, %v1733
  %v1735 = vand.u32 2147483647, %v1734
  %v1737 = vcvt.s32.f32 %v1730
  %v1738 = vmul.f32 %v1737, %v1735
  %v1739 = vxor.u32 %v1738, 2147483648
  %v1740 = vsel %vm1657, %v1739, %v1738
  %v1741 = vsub.s32 4, %v1717
  %v1742 = vsel %vm1657, %v1741, %v1717
  %v1743 = vsel %vm1656, %v506, %v1740
  %v1744 = vsel %vm1656, 0, %v1742
  %v1745 = vcosq.f32.pop %v1743
  %v1746 = vsinq.f32.pop %v1743
  %vm1747 = vweird.f32 %v506
  %v1748 = vadd.s32 %v1744, 3
  %v1749 = vand.u32 %v1748, 3
  %vm1750 = vcmp.lt.s32.totalorder %v1749, 2
  %vm1751 = vcmp.eq.s32.totalorder %v1749, 0
  %v1752 = vxor.u32 %v1746, 2147483648
  %v1753 = vsel %vm1751, %v1745, %v1752
  %vm1754 = vcmp.eq.s32.totalorder %v1749, 2
  %v1755 = vxor.u32 %v1745, 2147483648
  %v1756 = vsel %vm1754, %v1755, %v1746
  %v1757 = vsel %vm1750, %v1753, %v1756
  %v1758 = vsel %vm1747, nan, %v1757
  %v1759 = vand.u32 2147483647, %v507
  %vm1760 = vcmp.le.f32.partialorder %v1759, 0.7853982
  %vm1761 = vcmp.lt.s32.totalorder %v507, 0
  %v1762 = vand.u32 %v507, 2139095040
  %v1763 = vshrl.u32 %v1762, 23
  %v1764 = vsub.s32 %v1763, 127
  %v1765 = vand.u32 2147483647, %v507
  %v1766 = vand.u32 %v1765, 8388607
  %v1767 = vor.u32 %v1766, 8388608
  %v1768 = vsub.s32 0, %v1767
  %v1769 = vadd.s32 %v1764, 1
  %vm1770 = vcmp.gt.s32.totalorder %v1769, 0
  %v1771 = vsel %vm1770, %v1769, 0
  %v1772 = vshrl.u32 %v1771, 5
  %v1773 = vand.u32 %v1771, 31
  %v1774 = vsub.s32 32, %v1773
  %v1775 = vshrl.u32 683565275, %v1774
  %v1776 = vshll.u32 683565275, %v1773
  %v1777 = vshrl.u32 2475754826, %v1774
  %v1778 = vor.u32 %v1776, %v1777
  %v1779 = vshll.u32 2475754826, %v1773
  %v1780 = vshrl.u32 2131351028, %v1774
  %v1781 = vor.u32 %v1779, %v1780
  %v1782 = vshll.u32 2131351028, %v1773
  %v1783 = vshrl.u32 2102212464, %v1774
  %v1784 = vor.u32 %v1782, %v1783
  %v1785 = vshll.u32 2102212464, %v1773
  %v1786 = vshrl.u32 920167782, %v1774
  %v1787 = vor.u32 %v1785, %v1786
  %v1788 = vshll.u32 920167782, %v1773
  %v1789 = vshrl.u32 1326507024, %v1774
  %v1790 = vor.u32 %v1788, %v1789
  %vm1791 = vcmp.lt.s32.totalorder %v1772, 1
  %vm1792 = vcmp.lt.s32.totalorder %v1772, 2
  %vm1793 = vcmp.lt.s32.totalorder %v1772, 3
  %vm1794 = vcmp.lt.s32.totalorder %v1772, 4
  %v1795 = vsel %vm1791, %v1775, %v1778
  %v1796 = vsel %vm1794, %v1784, 2102212464
  %v1797 = vsel %vm1793, %v1781, %v1796
  %v1798 = vsel %vm1792, %v1795, %v1797
  %v1799 = vsel %vm1791, %v1778, %v1781
  %v1800 = vsel %vm1794, %v1787, 920167782
  %v1801 = vsel %vm1793, %v1784, %v1800
  %v1802 = vsel %vm1792, %v1799, %v1801
  %v1803 = vsel %vm1791, %v1781, %v1784
  %v1804 = vsel %vm1794, %v1790, 1326507024
  %v1805 = vsel %vm1793, %v1787, %v1804
  %v1806 = vsel %vm1792, %v1803, %v1805
  %v1807 = vshll.u32 %v1767, 8
  %v1808 = vmul.u32.u64.compose %v1807, %v1806
  %v1809 = vextract.low.u32 %v1808
  %v1810 = vextract.high.u32 %v1808
  %v1811 = vmul.u32.u64.compose %v1807, %v1802
  %v1812 = vextract.low.u32 %v1811
  %v1813 = vextract.high.u32 %v1811
  %v1814 = vmul.u32 %v1807, %v1798
  %v1815 = vadd.s32 %v1810, %v1812
  %vm1816 = vc.u32 %v1810, %v1812
  %v1817 = vadd.s32 %v1813, 1
  %v1818 = vsel %vm1816, %v1817, %v1813
  %v1819 = vadd.s32 %v1814, %v1818
  %v1820 = vadd.s32 %v1819, 536870912
  %v1821 = vshrl.u32 %v1820, 30
  %v1822 = vshll.u32 %v1821, 30
  %v1823 = vsub.s32 %v1819, %v1822
  %vm1824 = vcmp.lt.s32.totalorder %v1823, 0
  %v1825 = vsub.s32 0, %v1823
  %v1826 = vsel %vm1824, %v1825, %v1823
  %v1827 = vclz %v1826
  %v1828 = vsub.s32 %v1827, 2
  %vm1829 = vcmp.gt.s32.totalorder 0, %v1828
  %v1830 = vsel %vm1829, 0, %v1828
  %v1831 = vsub.s32 32, %v1830
  %v1832 = vshll.u32 %v1823, %v1830
  %v1833 = vshrl.u32 %v1815, %v1831
  %v1834 = vor.u32 %v1832, %v1833
  %v1835 = vsub.s32 4294967266, %v1830
  %v1836 = vadd.s32 %v1835, 127
  %v1837 = vshll.u32 %v1836, 23
  %v1838 = vor.u32 4788187, %v1837
  %v1839 = vand.u32 2147483647, %v1838
  %v1841 = vcvt.s32.f32 %v1834
  %v1842 = vmul.f32 %v1841, %v1839
  %v1843 = vxor.u32 %v1842, 2147483648
  %v1844 = vsel %vm1761, %v1843, %v1842
  %v1845 = vsub.s32 4, %v1821
  %v1846 = vsel %vm1761, %v1845, %v1821
  %v1847 = vsel %vm1760, %v507, %v1844
  %v1848 = vsel %vm1760, 0, %v1846
  %v1849 = vcosq.f32.pop %v1847
  %v1850 = vsinq.f32.pop %v1847
  %vm1851 = vweird.f32 %v507
  %v1852 = vadd.s32 %v1848, 3
  %v1853 = vand.u32 %v1852, 3
  %vm1854 = vcmp.lt.s32.totalorder %v1853, 2
  %vm1855 = vcmp.eq.s32.totalorder %v1853, 0
  %v1856 = vxor.u32 %v1850, 2147483648
  %v1857 = vsel %vm1855, %v1849, %v1856
  %vm1858 = vcmp.eq.s32.totalorder %v1853, 2
  %v1859 = vxor.u32 %v1849, 2147483648
  %v1860 = vsel %vm1858, %v1859, %v1850
  %v1861 = vsel %vm1854, %v1857, %v1860
  %v1862 = vsel %vm1851, nan, %v1861
  %v1863 = vand.u32 2147483647, %v508
  %vm1864 = vcmp.le.f32.partialorder %v1863, 0.7853982
  %vm1865 = vcmp.lt.s32.totalorder %v508, 0
  %v1866 = vand.u32 %v508, 2139095040
  %v1867 = vshrl.u32 %v1866, 23
  %v1868 = vsub.s32 %v1867, 127
  %v1869 = vand.u32 2147483647, %v508
  %v1870 = vand.u32 %v1869, 8388607
  %v1871 = vor.u32 %v1870, 8388608
  %v1872 = vsub.s32 0, %v1871
  %v1873 = vadd.s32 %v1868, 1
  %vm1874 = vcmp.gt.s32.totalorder %v1873, 0
  %v1875 = vsel %vm1874, %v1873, 0
  %v1876 = vshrl.u32 %v1875, 5
  %v1877 = vand.u32 %v1875, 31
  %v1878 = vsub.s32 32, %v1877
  %v1879 = vshrl.u32 683565275, %v1878
  %v1880 = vshll.u32 683565275, %v1877
  %v1881 = vshrl.u32 2475754826, %v1878
  %v1882 = vor.u32 %v1880, %v1881
  %v1883 = vshll.u32 2475754826, %v1877
  %v1884 = vshrl.u32 2131351028, %v1878
  %v1885 = vor.u32 %v1883, %v1884
  %v1886 = vshll.u32 2131351028, %v1877
  %v1887 = vshrl.u32 2102212464, %v1878
  %v1888 = vor.u32 %v1886, %v1887
  %v1889 = vshll.u32 2102212464, %v1877
  %v1890 = vshrl.u32 920167782, %v1878
  %v1891 = vor.u32 %v1889, %v1890
  %v1892 = vshll.u32 920167782, %v1877
  %v1893 = vshrl.u32 1326507024, %v1878
  %v1894 = vor.u32 %v1892, %v1893
  %vm1895 = vcmp.lt.s32.totalorder %v1876, 1
  %vm1896 = vcmp.lt.s32.totalorder %v1876, 2
  %vm1897 = vcmp.lt.s32.totalorder %v1876, 3
  %vm1898 = vcmp.lt.s32.totalorder %v1876, 4
  %v1899 = vsel %vm1895, %v1879, %v1882
  %v1900 = vsel %vm1898, %v1888, 2102212464
  %v1901 = vsel %vm1897, %v1885, %v1900
  %v1902 = vsel %vm1896, %v1899, %v1901
  %v1903 = vsel %vm1895, %v1882, %v1885
  %v1904 = vsel %vm1898, %v1891, 920167782
  %v1905 = vsel %vm1897, %v1888, %v1904
  %v1906 = vsel %vm1896, %v1903, %v1905
  %v1907 = vsel %vm1895, %v1885, %v1888
  %v1908 = vsel %vm1898, %v1894, 1326507024
  %v1909 = vsel %vm1897, %v1891, %v1908
  %v1910 = vsel %vm1896, %v1907, %v1909
  %v1911 = vshll.u32 %v1871, 8
  %v1912 = vmul.u32.u64.compose %v1911, %v1910
  %v1913 = vextract.low.u32 %v1912
  %v1914 = vextract.high.u32 %v1912
  %v1915 = vmul.u32.u64.compose %v1911, %v1906
  %v1916 = vextract.low.u32 %v1915
  %v1917 = vextract.high.u32 %v1915
  %v1918 = vmul.u32 %v1911, %v1902
  %v1919 = vadd.s32 %v1914, %v1916
  %vm1920 = vc.u32 %v1914, %v1916
  %v1921 = vadd.s32 %v1917, 1
  %v1922 = vsel %vm1920, %v1921, %v1917
  %v1923 = vadd.s32 %v1918, %v1922
  %v1924 = vadd.s32 %v1923, 536870912
  %v1925 = vshrl.u32 %v1924, 30
  %v1926 = vshll.u32 %v1925, 30
  %v1927 = vsub.s32 %v1923, %v1926
  %vm1928 = vcmp.lt.s32.totalorder %v1927, 0
  %v1929 = vsub.s32 0, %v1927
  %v1930 = vsel %vm1928, %v1929, %v1927
  %v1931 = vclz %v1930
  %v1932 = vsub.s32 %v1931, 2
  %vm1933 = vcmp.gt.s32.totalorder 0, %v1932
  %v1934 = vsel %vm1933, 0, %v1932
  %v1935 = vsub.s32 32, %v1934
  %v1936 = vshll.u32 %v1927, %v1934
  %v1937 = vshrl.u32 %v1919, %v1935
  %v1938 = vor.u32 %v1936, %v1937
  %v1939 = vsub.s32 4294967266, %v1934
  %v1940 = vadd.s32 %v1939, 127
  %v1941 = vshll.u32 %v1940, 23
  %v1942 = vor.u32 4788187, %v1941
  %v1943 = vand.u32 2147483647, %v1942
  %v1945 = vcvt.s32.f32 %v1938
  %v1946 = vmul.f32 %v1945, %v1943
  %v1947 = vxor.u32 %v1946, 2147483648
  %v1948 = vsel %vm1865, %v1947, %v1946
  %v1949 = vsub.s32 4, %v1925
  %v1950 = vsel %vm1865, %v1949, %v1925
  %v1951 = vsel %vm1864, %v508, %v1948
  %v1952 = vsel %vm1864, 0, %v1950
  %v1953 = vcosq.f32.pop %v1951
  %v1954 = vsinq.f32.pop %v1951
  %vm1955 = vweird.f32 %v508
  %v1956 = vadd.s32 %v1952, 3
  %v1957 = vand.u32 %v1956, 3
  %vm1958 = vcmp.lt.s32.totalorder %v1957, 2
  %vm1959 = vcmp.eq.s32.totalorder %v1957, 0
  %v1960 = vxor.u32 %v1954, 2147483648
  %v1961 = vsel %vm1959, %v1953, %v1960
  %vm1962 = vcmp.eq.s32.totalorder %v1957, 2
  %v1963 = vxor.u32 %v1953, 2147483648
  %v1964 = vsel %vm1962, %v1963, %v1954
  %v1965 = vsel %vm1958, %v1961, %v1964
  %v1966 = vsel %vm1955, nan, %v1965
  %v1967 = vand.u32 2147483647, %v509
  %vm1968 = vcmp.le.f32.partialorder %v1967, 0.7853982
  %vm1969 = vcmp.lt.s32.totalorder %v509, 0
  %v1970 = vand.u32 %v509, 2139095040
  %v1971 = vshrl.u32 %v1970, 23
  %v1972 = vsub.s32 %v1971, 127
  %v1973 = vand.u32 2147483647, %v509
  %v1974 = vand.u32 %v1973, 8388607
  %v1975 = vor.u32 %v1974, 8388608
  %v1976 = vsub.s32 0, %v1975
  %v1977 = vadd.s32 %v1972, 1
  %vm1978 = vcmp.gt.s32.totalorder %v1977, 0
  %v1979 = vsel %vm1978, %v1977, 0
  %v1980 = vshrl.u32 %v1979, 5
  %v1981 = vand.u32 %v1979, 31
  %v1982 = vsub.s32 32, %v1981
  %v1983 = vshrl.u32 683565275, %v1982
  %v1984 = vshll.u32 683565275, %v1981
  %v1985 = vshrl.u32 2475754826, %v1982
  %v1986 = vor.u32 %v1984, %v1985
  %v1987 = vshll.u32 2475754826, %v1981
  %v1988 = vshrl.u32 2131351028, %v1982
  %v1989 = vor.u32 %v1987, %v1988
  %v1990 = vshll.u32 2131351028, %v1981
  %v1991 = vshrl.u32 2102212464, %v1982
  %v1992 = vor.u32 %v1990, %v1991
  %v1993 = vshll.u32 2102212464, %v1981
  %v1994 = vshrl.u32 920167782, %v1982
  %v1995 = vor.u32 %v1993, %v1994
  %v1996 = vshll.u32 920167782, %v1981
  %v1997 = vshrl.u32 1326507024, %v1982
  %v1998 = vor.u32 %v1996, %v1997
  %vm1999 = vcmp.lt.s32.totalorder %v1980, 1
  %vm2000 = vcmp.lt.s32.totalorder %v1980, 2
  %vm2001 = vcmp.lt.s32.totalorder %v1980, 3
  %vm2002 = vcmp.lt.s32.totalorder %v1980, 4
  %v2003 = vsel %vm1999, %v1983, %v1986
  %v2004 = vsel %vm2002, %v1992, 2102212464
  %v2005 = vsel %vm2001, %v1989, %v2004
  %v2006 = vsel %vm2000, %v2003, %v2005
  %v2007 = vsel %vm1999, %v1986, %v1989
  %v2008 = vsel %vm2002, %v1995, 920167782
  %v2009 = vsel %vm2001, %v1992, %v2008
  %v2010 = vsel %vm2000, %v2007, %v2009
  %v2011 = vsel %vm1999, %v1989, %v1992
  %v2012 = vsel %vm2002, %v1998, 1326507024
  %v2013 = vsel %vm2001, %v1995, %v2012
  %v2014 = vsel %vm2000, %v2011, %v2013
  %v2015 = vshll.u32 %v1975, 8
  %v2016 = vmul.u32.u64.compose %v2015, %v2014
  %v2017 = vextract.low.u32 %v2016
  %v2018 = vextract.high.u32 %v2016
  %v2019 = vmul.u32.u64.compose %v2015, %v2010
  %v2020 = vextract.low.u32 %v2019
  %v2021 = vextract.high.u32 %v2019
  %v2022 = vmul.u32 %v2015, %v2006
  %v2023 = vadd.s32 %v2018, %v2020
  %vm2024 = vc.u32 %v2018, %v2020
  %v2025 = vadd.s32 %v2021, 1
  %v2026 = vsel %vm2024, %v2025, %v2021
  %v2027 = vadd.s32 %v2022, %v2026
  %v2028 = vadd.s32 %v2027, 536870912
  %v2029 = vshrl.u32 %v2028, 30
  %v2030 = vshll.u32 %v2029, 30
  %v2031 = vsub.s32 %v2027, %v2030
  %vm2032 = vcmp.lt.s32.totalorder %v2031, 0
  %v2033 = vsub.s32 0, %v2031
  %v2034 = vsel %vm2032, %v2033, %v2031
  %v2035 = vclz %v2034
  %v2036 = vsub.s32 %v2035, 2
  %vm2037 = vcmp.gt.s32.totalorder 0, %v2036
  %v2038 = vsel %vm2037, 0, %v2036
  %v2039 = vsub.s32 32, %v2038
  %v2040 = vshll.u32 %v2031, %v2038
  %v2041 = vshrl.u32 %v2023, %v2039
  %v2042 = vor.u32 %v2040, %v2041
  %v2043 = vsub.s32 4294967266, %v2038
  %v2044 = vadd.s32 %v2043, 127
  %v2045 = vshll.u32 %v2044, 23
  %v2046 = vor.u32 4788187, %v2045
  %v2047 = vand.u32 2147483647, %v2046
  %v2049 = vcvt.s32.f32 %v2042
  %v2050 = vmul.f32 %v2049, %v2047
  %v2051 = vxor.u32 %v2050, 2147483648
  %v2052 = vsel %vm1969, %v2051, %v2050
  %v2053 = vsub.s32 4, %v2029
  %v2054 = vsel %vm1969, %v2053, %v2029
  %v2055 = vsel %vm1968, %v509, %v2052
  %v2056 = vsel %vm1968, 0, %v2054
  %v2057 = vcosq.f32.pop %v2055
  %v2058 = vsinq.f32.pop %v2055
  %vm2059 = vweird.f32 %v509
  %v2060 = vadd.s32 %v2056, 3
  %v2061 = vand.u32 %v2060, 3
  %vm2062 = vcmp.lt.s32.totalorder %v2061, 2
  %vm2063 = vcmp.eq.s32.totalorder %v2061, 0
  %v2064 = vxor.u32 %v2058, 2147483648
  %v2065 = vsel %vm2063, %v2057, %v2064
  %vm2066 = vcmp.eq.s32.totalorder %v2061, 2
  %v2067 = vxor.u32 %v2057, 2147483648
  %v2068 = vsel %vm2066, %v2067, %v2058
  %v2069 = vsel %vm2062, %v2065, %v2068
  %v2070 = vsel %vm2059, nan, %v2069
  %v2071 = vand.u32 2147483647, %v510
  %vm2072 = vcmp.le.f32.partialorder %v2071, 0.7853982
  %vm2073 = vcmp.lt.s32.totalorder %v510, 0
  %v2074 = vand.u32 %v510, 2139095040
  %v2075 = vshrl.u32 %v2074, 23
  %v2076 = vsub.s32 %v2075, 127
  %v2077 = vand.u32 2147483647, %v510
  %v2078 = vand.u32 %v2077, 8388607
  %v2079 = vor.u32 %v2078, 8388608
  %v2080 = vsub.s32 0, %v2079
  %v2081 = vadd.s32 %v2076, 1
  %vm2082 = vcmp.gt.s32.totalorder %v2081, 0
  %v2083 = vsel %vm2082, %v2081, 0
  %v2084 = vshrl.u32 %v2083, 5
  %v2085 = vand.u32 %v2083, 31
  %v2086 = vsub.s32 32, %v2085
  %v2087 = vshrl.u32 683565275, %v2086
  %v2088 = vshll.u32 683565275, %v2085
  %v2089 = vshrl.u32 2475754826, %v2086
  %v2090 = vor.u32 %v2088, %v2089
  %v2091 = vshll.u32 2475754826, %v2085
  %v2092 = vshrl.u32 2131351028, %v2086
  %v2093 = vor.u32 %v2091, %v2092
  %v2094 = vshll.u32 2131351028, %v2085
  %v2095 = vshrl.u32 2102212464, %v2086
  %v2096 = vor.u32 %v2094, %v2095
  %v2097 = vshll.u32 2102212464, %v2085
  %v2098 = vshrl.u32 920167782, %v2086
  %v2099 = vor.u32 %v2097, %v2098
  %v2100 = vshll.u32 920167782, %v2085
  %v2101 = vshrl.u32 1326507024, %v2086
  %v2102 = vor.u32 %v2100, %v2101
  %vm2103 = vcmp.lt.s32.totalorder %v2084, 1
  %vm2104 = vcmp.lt.s32.totalorder %v2084, 2
  %vm2105 = vcmp.lt.s32.totalorder %v2084, 3
  %vm2106 = vcmp.lt.s32.totalorder %v2084, 4
  %v2107 = vsel %vm2103, %v2087, %v2090
  %v2108 = vsel %vm2106, %v2096, 2102212464
  %v2109 = vsel %vm2105, %v2093, %v2108
  %v2110 = vsel %vm2104, %v2107, %v2109
  %v2111 = vsel %vm2103, %v2090, %v2093
  %v2112 = vsel %vm2106, %v2099, 920167782
  %v2113 = vsel %vm2105, %v2096, %v2112
  %v2114 = vsel %vm2104, %v2111, %v2113
  %v2115 = vsel %vm2103, %v2093, %v2096
  %v2116 = vsel %vm2106, %v2102, 1326507024
  %v2117 = vsel %vm2105, %v2099, %v2116
  %v2118 = vsel %vm2104, %v2115, %v2117
  %v2119 = vshll.u32 %v2079, 8
  %v2120 = vmul.u32.u64.compose %v2119, %v2118
  %v2121 = vextract.low.u32 %v2120
  %v2122 = vextract.high.u32 %v2120
  %v2123 = vmul.u32.u64.compose %v2119, %v2114
  %v2124 = vextract.low.u32 %v2123
  %v2125 = vextract.high.u32 %v2123
  %v2126 = vmul.u32 %v2119, %v2110
  %v2127 = vadd.s32 %v2122, %v2124
  %vm2128 = vc.u32 %v2122, %v2124
  %v2129 = vadd.s32 %v2125, 1
  %v2130 = vsel %vm2128, %v2129, %v2125
  %v2131 = vadd.s32 %v2126, %v2130
  %v2132 = vadd.s32 %v2131, 536870912
  %v2133 = vshrl.u32 %v2132, 30
  %v2134 = vshll.u32 %v2133, 30
  %v2135 = vsub.s32 %v2131, %v2134
  %vm2136 = vcmp.lt.s32.totalorder %v2135, 0
  %v2137 = vsub.s32 0, %v2135
  %v2138 = vsel %vm2136, %v2137, %v2135
  %v2139 = vclz %v2138
  %v2140 = vsub.s32 %v2139, 2
  %vm2141 = vcmp.gt.s32.totalorder 0, %v2140
  %v2142 = vsel %vm2141, 0, %v2140
  %v2143 = vsub.s32 32, %v2142
  %v2144 = vshll.u32 %v2135, %v2142
  %v2145 = vshrl.u32 %v2127, %v2143
  %v2146 = vor.u32 %v2144, %v2145
  %v2147 = vsub.s32 4294967266, %v2142
  %v2148 = vadd.s32 %v2147, 127
  %v2149 = vshll.u32 %v2148, 23
  %v2150 = vor.u32 4788187, %v2149
  %v2151 = vand.u32 2147483647, %v2150
  %v2153 = vcvt.s32.f32 %v2146
  %v2154 = vmul.f32 %v2153, %v2151
  %v2155 = vxor.u32 %v2154, 2147483648
  %v2156 = vsel %vm2073, %v2155, %v2154
  %v2157 = vsub.s32 4, %v2133
  %v2158 = vsel %vm2073, %v2157, %v2133
  %v2159 = vsel %vm2072, %v510, %v2156
  %v2160 = vsel %vm2072, 0, %v2158
  %v2161 = vcosq.f32.pop %v2159
  %v2162 = vsinq.f32.pop %v2159
  %vm2163 = vweird.f32 %v510
  %v2164 = vadd.s32 %v2160, 3
  %v2165 = vand.u32 %v2164, 3
  %vm2166 = vcmp.lt.s32.totalorder %v2165, 2
  %vm2167 = vcmp.eq.s32.totalorder %v2165, 0
  %v2168 = vxor.u32 %v2162, 2147483648
  %v2169 = vsel %vm2167, %v2161, %v2168
  %vm2170 = vcmp.eq.s32.totalorder %v2165, 2
  %v2171 = vxor.u32 %v2161, 2147483648
  %v2172 = vsel %vm2170, %v2171, %v2162
  %v2173 = vsel %vm2166, %v2169, %v2172
  %v2174 = vsel %vm2163, nan, %v2173
  %v2175 = vld [vmem:[%s5] sm:$0xff]
  %v2176 = vld [vmem:[%s6] sm:$0xff]
  %2178 = vset.pattern.permute.xlu0 0
  %2179 = vperm.xlu0 %2178, %v2176
  %v2180 = vpop.permute.xlu0 %2179
  %2182 = vmatprep.subr.mxu0 0.0
  %2183 = vmatpush1.msra.mxu0 %v2174
  %2184 = vmatprep.subr.mxu0 0.0
  %2185 = vmatpush1.msra.mxu0 %v2070
  %2186 = vmatprep.subr.mxu0 0.0
  %2187 = vmatpush1.msra.mxu0 %v1966
  %2188 = vmatprep.subr.mxu0 0.0
  %2189 = vmatpush1.msra.mxu0 %v1862
  %2190 = vmatprep.subr.mxu0 0.0
  %2191 = vmatpush1.msra.mxu0 %v1758
  %2192 = vmatprep.subr.mxu0 0.0
  %2193 = vmatpush1.msra.mxu0 %v1654
  %2194 = vmatprep.subr.mxu0 0.0
  %2195 = vmatpush1.msra.mxu0 %v1550
  %2196 = vmatprep.subr.mxu0 0.0
  %2197 = vmatpush1.msra.mxu0 %v1446
  %2198 = vmatprep.subr.mxu0 0.0
  %2199 = vmatpush1.msra.mxu0 %v1342
  %2200 = vmatprep.subr.mxu0 0.0
  %2201 = vmatpush1.msra.mxu0 %v1238
  %2202 = vmatprep.subr.mxu0 0.0
  %2203 = vmatpush1.msra.mxu0 %v1134
  %2204 = vmatprep.subr.mxu0 0.0
  %2205 = vmatpush1.msra.mxu0 %v1030
  %2206 = vmatprep.subr.mxu0 0.0
  %2207 = vmatpush1.msra.mxu0 %v926
  %2208 = vmatprep.subr.mxu0 0.0
  %2209 = vmatpush1.msra.mxu0 %v822
  %2210 = vmatprep.subr.mxu0 0.0
  %2211 = vmatpush1.msra.mxu0 %v718
  %2212 = vmatprep.subr.mxu0 0.0
  %2213 = vmatpush1.msra.mxu0 %v614
  %2214 = vmatprep.subr.mxu0 0.0
  %2215 = vmatpush2.msra.mxu0 0.0
  %2216 = vmatprep.subr.mxu0 0.0
  %2217 = vmatpush2.msra.mxu0 0.0
  %2218 = vmatprep.subr.mxu0 0.0
  %2219 = vmatpush2.msra.mxu0 0.0
  %2220 = vmatprep.subr.mxu0 0.0
  %2221 = vmatpush2.msra.mxu0 0.0
  %2222 = vmatprep.subr.mxu0 0.0
  %2223 = vmatpush2.msra.mxu0 0.0
  %2224 = vmatprep.subr.mxu0 0.0
  %2225 = vmatpush2.msra.mxu0 0.0
  %2226 = vmatprep.subr.mxu0 0.0
  %2227 = vmatpush2.msra.mxu0 0.0
  %2228 = vmatprep.subr.mxu0 0.0
  %2229 = vmatpush2.msra.mxu0 0.0
  %2230 = vmatprep.subr.mxu0 0.0
  %2231 = vmatpush2.msra.mxu0 0.0
  %2232 = vmatprep.subr.mxu0 0.0
  %2233 = vmatpush2.msra.mxu0 0.0
  %2234 = vmatprep.subr.mxu0 0.0
  %2235 = vmatpush2.msra.mxu0 0.0
  %2236 = vmatprep.subr.mxu0 0.0
  %2237 = vmatpush2.msra.mxu0 0.0
  %2238 = vmatprep.subr.mxu0 0.0
  %2239 = vmatpush2.msra.mxu0 0.0
  %2240 = vmatprep.subr.mxu0 0.0
  %2241 = vmatpush2.msra.mxu0 0.0
  %2242 = vmatprep.subr.mxu0 0.0
  %2243 = vmatpush2.msra.mxu0 0.0
  %2244 = vmatprep.subr.mxu0 0.0
  %2245 = vmatpush2.msra.mxu0 0.0
  %2246 = vmatprep.mubr.f32.mxu0 0.0
  %2247 = vmatmul.mubr.f32.gmra.mxu0 %v2175
  %v2248 = vpop.f32.mrf.mxu0
  %v2249 = vadd.f32 %v2180, %v2248
  %v2250 = vpop.f32.mrf.mxu0
  %2251 = vdwg.mxu0
  %v2253 = vrot.slane %v2249, 1
  %v2255 = vmin.f32 %v2249, %v2253
  %v2257 = vrot.slane %v2255, 1
  %v2259 = vmin.f32 %v2249, %v2257
  %v2260 = vlaneseq
  %v2261 = vshrl.u32 %v2260, 7
  %vm2262 = vcmp.eq.s32.totalorder %v2261, 4
  %v2263 = vlaneseq
  %v2264 = vshrl.u32 %v2263, 7
  %v2265 = vsub.s32 0, %v2264
  %v2266 = vrot.slane %v2259, %v2265
  %v2267 = vsel %vm2262, %v2266, %v2249
  %vm2268 = vcmask 64512
  %2269 = vst.msk [vmem:[%s7] sm:$0xff] %vm2268, %v2267
  // Predicated region
  $region30: #{critic_forward.1} parent=0 // pred_check
    _
  $region31: #{critic_forward.1} parent=0 // pred_check_branch
    %2271 = sbr.rel (0) target = $region33
  $region32: #{critic_forward.1} parent=0 // pred_region
    _
  $region33: #{critic_forward.1} parent=0 // pred_fallthru
    _
  // Predicated region
  $region34: #{critic_forward.1} parent=0 // pred_check
    _
  $region35: #{critic_forward.1} parent=0 // pred_check_branch
    %2273 = sbr.rel (0) target = $region37
  $region36: #{critic_forward.1} parent=0 // pred_region
    _
  $region37: #{critic_forward.1} parent=0 // pred_fallthru
    _

</llo_original>
